<compile_context>
chip_gen: v7x
topology: tpu7x:2x2x1
jax: 0.10.0
libtpu: 0.0.40
codegen_flags: <defaults>
</compile_context>

<pallas_src>
import functools

import jax
import jax.numpy as jnp
from jax.experimental import pallas as pl
from jax.experimental.pallas import tpu as pltpu


def _round_up(v, m):
    return ((v + m - 1) // m) * m


def _vmem_budgets():
    """Generation-aware (tile-sizing budget, scoped-VMEM limit) in bytes."""
    cap = None
    try:
        cap = getattr(pltpu.get_tpu_info(), "vmem_capacity_bytes", None)
    except Exception:
        cap = None
    if not cap:
        cap = 64 * 1024 * 1024          # conservative fallback (v7x per-core VMEM)
    budget = int(cap * 0.45)            # live-bytes budget for tile sizing
    limit = int(cap * 0.75)             # explicit scoped-VMEM limit
    return budget, limit


def _tile_bytes(th, W, C1, C_, C2):
    """Rough padded VMEM footprint of one grid step (double-buffered blocks)."""
    c1p, cmp_, c2p = (_round_up(c, 128) for c in (C1, C_, C2))
    wp8 = _round_up(W, 8)
    wp16 = _round_up(W, 16)
    x_tile = th * wp8 * c1p * 4                    # f32 input tile
    halo = 2 * wp8 * c1p * 4
    out_tile = th * wp8 * c2p * 4                  # f32 output tile
    h1buf = (th + 2) * wp16 * cmp_ * 2             # bf16 cv1 scratch
    weights = (9 * cmp_ * c2p + c1p * cmp_) * 2 + 2 * (cmp_ + c2p) * 4
    # in-flight values: bf16 x copy, f32 h1, running y + one partial + roll temp
    live = th * wp8 * (c1p * 2 + cmp_ * 4 + 3 * c2p * 4)
    return 2 * (x_tile + halo + out_tile) + h1buf + 2 * weights + live


def _choose_tile_h(N, H, W, C1, C_, C2, budget_bytes, min_steps=8):
    """Largest row-tile TH dividing H that fits the VMEM budget, preferring a
    TH that still yields >= min_steps grid steps (keeps both v7x TensorCores
    busy and gives BlockSpec double-buffering something to overlap)."""
    best = None
    for th in range(H, 0, -1):
        if H % th:
            continue
        if _tile_bytes(th, W, C1, C_, C2) > budget_bytes:
            continue
        if best is None:
            best = th
        if N * (H // th) >= min_steps:
            return th
    return best if best is not None else 1


def _bottleneck_kernel(x_ref, xh_ref, w1_ref, s1_ref, b1_ref, w2_ref, s2_ref,
                       b2_ref, out_ref, h1_ref, *, add, th, width, ht):
    # x_ref : (1, TH, W, C1) f32       xh_ref: (1, 2, W, C1) f32 (halo rows)
    # w1_ref: (C1, C_) bf16            w2_ref: (9, C_, C2) bf16 (tap-major ky*3+kx)
    # s*/b* : (1, C) f32               out_ref: (1, TH, W, C2)
    # h1_ref: (TH+2, W, C_) bf16 scratch (cv1 output + one halo row above/below)
    TH, W = th, width
    C1 = x_ref.shape[-1]
    C_ = w1_ref.shape[1]
    C2 = w2_ref.shape[2]
    i = pl.program_id(1)                       # row-tile index within the image

    # Hoisted once per grid step; rely on implicit row broadcast below.
    w1 = w1_ref[...]                           # (C1, C_)  bf16
    s1 = s1_ref[...]                           # (1, C_)   f32
    b1 = b1_ref[...]
    s2 = s2_ref[...]                           # (1, C2)   f32
    b2 = b2_ref[...]

    # ---- cv1 (1x1 conv == channel matmul) + folded BN + SiLU: main TH rows ----
    # NOTE: the (TH, W) <-> TH*W merges/splits below are free relayouts only when
    # W is a multiple of the sublane tile (8 for f32, 16 for bf16).
    x_f32 = x_ref[0]                                                   # (TH, W, C1)
    xm = x_f32.reshape(TH * W, C1).astype(jnp.bfloat16)
    h1 = jnp.dot(xm, w1, preferred_element_type=jnp.float32)           # MXU, f32 acc
    h1 = h1 * s1 + b1
    h1 = h1 * jax.nn.sigmoid(h1)                                       # SiLU (f32)
    h1_ref[1:TH + 1] = h1.reshape(TH, W, C_).astype(jnp.bfloat16)      # bf16 scratch

    # ---- cv1 on the two halo rows (row above / below this tile) ----
    xh = xh_ref[0].reshape(2 * W, C1).astype(jnp.bfloat16)
    hh = jnp.dot(xh, w1, preferred_element_type=jnp.float32)
    hh = hh * s1 + b1
    hh = (hh * jax.nn.sigmoid(hh)).reshape(2, W, C_)
    # Halo rows that fall outside the image are cv2's zero padding -> scale by 0.
    top_keep = jnp.where(i > 0, 1.0, 0.0)
    bot_keep = jnp.where(i < ht - 1, 1.0, 0.0)
    h1_ref[0:1] = (hh[0:1] * top_keep).astype(jnp.bfloat16)
    h1_ref[TH + 1:TH + 2] = (hh[1:2] * bot_keep).astype(jnp.bfloat16)

    # ---- cv2 (3x3 conv, pad=1): 9 column-aligned bf16 matmuls, value accum ----
    # For each kx the three ky taps are summed on aligned data (row shifts are
    # leading-dim slices of the scratch).  The kx = 0 / 2 column shifts are then
    # applied to the f32 partial sums with pltpu.roll (XLU) + edge-column masks,
    # so no unaligned sublane slice of the scratch is ever taken and the
    # accumulator stays a single value chain (no VMEM read-modify-write).
    def partial_kx(kx):
        acc = jnp.dot(h1_ref[0:TH].reshape(TH * W, C_), w2_ref[kx],
                      preferred_element_type=jnp.float32)
        for ky in range(1, 3):
            acc = acc + jnp.dot(h1_ref[ky:ky + TH].reshape(TH * W, C_),
                                w2_ref[3 * ky + kx],
                                preferred_element_type=jnp.float32)
        return acc                                          # (TH*W, C2) f32

    col = jax.lax.broadcasted_iota(jnp.int32, (TH * W, C2), 0) % W

    left = pltpu.roll(partial_kx(0), shift=1, axis=0)       # needs h1[.., x-1]
    y = jnp.where(col == 0, 0.0, left)
    y = y + partial_kx(1)                                   # center column
    right = pltpu.roll(partial_kx(2), shift=TH * W - 1, axis=0)   # == shift by -1
    y = y + jnp.where(col == W - 1, 0.0, right)

    y = y * s2 + b2
    y = y * jax.nn.sigmoid(y)                               # SiLU (f32)
    if add:
        y = y + x_f32.reshape(TH * W, C1)                   # full-precision residual
    out_ref[0] = y.reshape(TH, W, C2).astype(out_ref.dtype)


def bottleneck_pallas(x_nhwc, params, *, shortcut=True, tile_h=None, out_dtype=None):
    """Fused YOLOv5 Bottleneck forward.  x_nhwc: (N, H, W, C1).  Returns (N, H, W, C2)."""
    w1, s1, b1, w2, s2, b2 = params
    N, H, W, C1 = x_nhwc.shape
    C_ = w1.shape[1]
    C2 = w2.shape[3]
    add = bool(shortcut) and (C1 == C2)

    budget, vmem_limit = _vmem_budgets()
    TH = tile_h if tile_h is not None else _choose_tile_h(N, H, W, C1, C_, C2, budget)
    if H % TH != 0:
        raise ValueError(f"tile_h={TH} must divide H={H}")
    HT = H // TH

    # x stays f32 (full-precision residual); MXU operands are cast in-kernel /
    # here for the weights.
    xf = x_nhwc.astype(jnp.float32)
    w1b = w1.astype(jnp.bfloat16)                             # (C1, C_)
    w2b = w2.reshape(9, C_, C2).astype(jnp.bfloat16)          # tap-major (ky*3+kx)
    s1f = s1.reshape(1, C_).astype(jnp.float32)
    b1f = b1.reshape(1, C_).astype(jnp.float32)
    s2f = s2.reshape(1, C2).astype(jnp.float32)
    b2f = b2.reshape(1, C2).astype(jnp.float32)

    # Halo rows for the 3x3 conv: the row above / below every TH-row tile
    # (2 rows per tile -> negligible extra HBM traffic; keeps every operand a
    # plain blocked, auto-pipelined BlockSpec with no overlapping windows).
    xr = xf.reshape(N, HT, TH, W, C1)
    zrow = jnp.zeros((N, 1, W, C1), jnp.float32)
    top = jnp.concatenate([zrow, xr[:, :HT - 1, TH - 1]], axis=1)   # (N, HT, W, C1)
    bot = jnp.concatenate([xr[:, 1:, 0], zrow], axis=1)             # (N, HT, W, C1)
    x_halo = jnp.stack([top, bot], axis=2).reshape(N, 2 * HT, W, C1)

    kernel = functools.partial(_bottleneck_kernel, add=add, th=TH, width=W, ht=HT)
    out_dtype = x_nhwc.dtype if out_dtype is None else out_dtype

    return pl.pallas_call(
        kernel,
        out_shape=jax.ShapeDtypeStruct((N, H, W, C2), out_dtype),
        grid_spec=pltpu.PrefetchScalarGridSpec(
            num_scalar_prefetch=0,
            grid=(N, HT),
            in_specs=[
                pl.BlockSpec((1, TH, W, C1), lambda n, i: (n, i, 0, 0)),
                pl.BlockSpec((1, 2, W, C1), lambda n, i: (n, i, 0, 0)),
                pl.BlockSpec((C1, C_), lambda n, i: (0, 0)),
                pl.BlockSpec((1, C_), lambda n, i: (0, 0)),
                pl.BlockSpec((1, C_), lambda n, i: (0, 0)),
                pl.BlockSpec((9, C_, C2), lambda n, i: (0, 0, 0)),
                pl.BlockSpec((1, C2), lambda n, i: (0, 0)),
                pl.BlockSpec((1, C2), lambda n, i: (0, 0)),
            ],
            out_specs=pl.BlockSpec((1, TH, W, C2), lambda n, i: (n, i, 0, 0)),
            scratch_shapes=[
                pltpu.VMEM((TH + 2, W, C_), jnp.bfloat16),   # cv1 output + halo rows
            ],
        ),
        compiler_params=pltpu.CompilerParams(
            dimension_semantics=("parallel", "parallel"),
            vmem_limit_bytes=vmem_limit),
    )(xf, x_halo, w1b, s1f, b1f, w2b, s2f, b2f)


def bottleneck_pallas_nchw(x_nchw, params, *, shortcut=True, tile_h=None):
    """PyTorch-layout adapter (avoid in hot paths; prefer NHWC end-to-end)."""
    x = jnp.transpose(x_nchw, (0, 2, 3, 1))
    y = bottleneck_pallas(x, params, shortcut=shortcut, tile_h=tile_h)
    return jnp.transpose(y, (0, 3, 1, 2))


def init_params(key, c1, c2, e=0.5, eps=1e-3):
    """Deterministic synthetic parameters (conv weights in IO / HWIO layout,
    BatchNorm running stats folded into per-channel scale/bias)."""
    c_ = int(c2 * e)
    k1, k2, k3, k4, k5, k6, k7, k8 = jax.random.split(key, 8)

    w1 = jax.random.normal(k1, (c1, c_), jnp.float32) * 0.2          # 1x1 conv
    w2 = jax.random.normal(k2, (3, 3, c_, c2), jnp.float32) * 0.1    # 3x3 conv

    gamma1 = 1.0 + 0.1 * jax.random.normal(k3, (c_,), jnp.float32)
    beta1 = 0.1 * jax.random.normal(k4, (c_,), jnp.float32)
    mean1 = 0.1 * jax.random.normal(k5, (c_,), jnp.float32)
    var1 = jnp.abs(jax.random.normal(k6, (c_,), jnp.float32)) + 0.5

    gamma2 = 1.0 + 0.1 * jax.random.normal(k7, (c2,), jnp.float32)
    beta2 = 0.1 * jax.random.normal(k8, (c2,), jnp.float32)
    mean2 = jnp.zeros((c2,), jnp.float32)
    var2 = jnp.ones((c2,), jnp.float32)

    s1 = gamma1 / jnp.sqrt(var1 + eps)
    b1 = beta1 - mean1 * s1
    s2 = gamma2 / jnp.sqrt(var2 + eps)
    b2 = beta2 - mean2 * s2

    return (w1, s1.reshape(1, c_), b1.reshape(1, c_),
            w2, s2.reshape(1, c2), b2.reshape(1, c2))


def bottleneck_reference(x_nhwc, params, *, shortcut=True):
    """Pure-JAX reference (lax.conv).  Mirrors the kernel's bf16 rounding of the
    MXU inputs (conv-path x, conv weights, cv1 output) while keeping BN, SiLU,
    accumulation and the shortcut residual in f32 (PyTorch-faithful residual)."""
    w1, s1, b1, w2, s2, b2 = params
    f32 = jnp.float32
    x = x_nhwc.astype(f32)
    xc = x.astype(jnp.bfloat16).astype(f32)          # conv-path rounding
    w1r = w1.astype(jnp.bfloat16).astype(f32)
    w2r = w2.astype(jnp.bfloat16).astype(f32)
    c1 = x.shape[-1]

    def silu(v):
        return v * jax.nn.sigmoid(v)

    h = jax.lax.conv_general_dilated(
        xc, w1r.reshape(1, 1, *w1.shape), (1, 1), [(0, 0), (0, 0)],
        dimension_numbers=("NHWC", "HWIO", "NHWC"),
        precision=jax.lax.Precision.HIGHEST)
    h = silu(h * s1.reshape(-1) + b1.reshape(-1))
    h = h.astype(jnp.bfloat16).astype(f32)           # kernel stores cv1 out in bf16
    y = jax.lax.conv_general_dilated(
        h, w2r, (1, 1), [(1, 1), (1, 1)],
        dimension_numbers=("NHWC", "HWIO", "NHWC"),
        precision=jax.lax.Precision.HIGHEST)
    y = silu(y * s2.reshape(-1) + b2.reshape(-1))
    if shortcut and c1 == y.shape[-1]:
        y = y + x                                    # full-precision residual
    return y


if __name__ == "__main__":
    # Bottleneck(c1=4, c2=4, e=0.5) -> c_ = 2.  Activations stay NHWC end-to-end
    # (no NCHW transposes in the hot path; see bottleneck_pallas_nchw).
    N, C, H, W = 2, 4, 16, 16
    key = jax.random.PRNGKey(0)
    kx_, kp = jax.random.split(key)

    x = jax.random.normal(kx_, (N, H, W, C), jnp.float32)
    params = init_params(kp, C, C, e=0.5)

    ref = bottleneck_reference(x, params, shortcut=True)

    # Default tiling (generation-aware budget, >= 8 grid steps) plus forced
    # single-tile / multi-tile configurations to exercise halo + padding paths.
    for tile_h in (None, 16, 8, 4):
        out = jax.block_until_ready(
            bottleneck_pallas(x, params, shortcut=True, tile_h=tile_h))
        assert out.shape == (N, H, W, C)
        err = float(jnp.max(jnp.abs(out - ref)))
        assert err < 2e-2, f"tile_h={tile_h}: max abs err {err} vs JAX reference"

    print("KERNEL_OK")
</pallas_src>

<mosaic_0001>
module attributes {stable_mosaic.version = 11 : i64} {
  func.func @_bottleneck_kernel(%arg0: i32, %arg1: i32, %arg2: memref<1x4x16x4xf32, #tpu.memory_space<vmem>>, %arg3: memref<1x2x16x4xf32, #tpu.memory_space<vmem>>, %arg4: memref<4x2xbf16, #tpu.memory_space<vmem>>, %arg5: memref<1x2xf32, #tpu.memory_space<vmem>>, %arg6: memref<1x2xf32, #tpu.memory_space<vmem>>, %arg7: memref<9x2x4xbf16, #tpu.memory_space<vmem>>, %arg8: memref<1x4xf32, #tpu.memory_space<vmem>>, %arg9: memref<1x4xf32, #tpu.memory_space<vmem>>, %arg10: memref<1x4x16x4xf32, #tpu.memory_space<vmem>>, %arg11: memref<6x16x2xbf16, #tpu.memory_space<vmem>>) attributes {dimension_semantics = [#tpu.dimension_semantics<parallel>, #tpu.dimension_semantics<parallel>], iteration_bounds = array<i64: 2, 4>, scalar_prefetch = 0 : i64, scratch_operands = 1 : i64, tpu.core_type = #tpu.core_type<tc>, window_params = [{transform_indices = @transform_0, window_bounds = array<i64: 1, 4, 16, 4>}, {transform_indices = @transform_1, window_bounds = array<i64: 1, 2, 16, 4>}, {pipeline_mode = #tpu.pipeline_mode<synchronous>, transform_indices = @transform_2, window_bounds = array<i64: 4, 2>}, {pipeline_mode = #tpu.pipeline_mode<synchronous>, transform_indices = @transform_3, window_bounds = array<i64: 1, 2>}, {pipeline_mode = #tpu.pipeline_mode<synchronous>, transform_indices = @transform_4, window_bounds = array<i64: 1, 2>}, {pipeline_mode = #tpu.pipeline_mode<synchronous>, transform_indices = @transform_5, window_bounds = array<i64: 9, 2, 4>}, {pipeline_mode = #tpu.pipeline_mode<synchronous>, transform_indices = @transform_6, window_bounds = array<i64: 1, 4>}, {pipeline_mode = #tpu.pipeline_mode<synchronous>, transform_indices = @transform_7, window_bounds = array<i64: 1, 4>}, {transform_indices = @transform_8, window_bounds = array<i64: 1, 4, 16, 4>}]} {
    %c0 = arith.constant 0 : index
    %c0_0 = arith.constant 0 : index
    %0 = vector.load %arg4[%c0, %c0_0] : memref<4x2xbf16, #tpu.memory_space<vmem>>, vector<4x2xbf16>
    %c0_1 = arith.constant 0 : index
    %c0_2 = arith.constant 0 : index
    %1 = vector.load %arg5[%c0_1, %c0_2] : memref<1x2xf32, #tpu.memory_space<vmem>>, vector<1x2xf32>
    %c0_3 = arith.constant 0 : index
    %c0_4 = arith.constant 0 : index
    %2 = vector.load %arg6[%c0_3, %c0_4] : memref<1x2xf32, #tpu.memory_space<vmem>>, vector<1x2xf32>
    %c0_5 = arith.constant 0 : index
    %c0_6 = arith.constant 0 : index
    %3 = vector.load %arg8[%c0_5, %c0_6] : memref<1x4xf32, #tpu.memory_space<vmem>>, vector<1x4xf32>
    %c0_7 = arith.constant 0 : index
    %c0_8 = arith.constant 0 : index
    %4 = vector.load %arg9[%c0_7, %c0_8] : memref<1x4xf32, #tpu.memory_space<vmem>>, vector<1x4xf32>
    %c0_9 = arith.constant 0 : index
    %c0_10 = arith.constant 0 : index
    %c0_11 = arith.constant 0 : index
    %c0_12 = arith.constant 0 : index
    %5 = vector.load %arg2[%c0_9, %c0_10, %c0_11, %c0_12] : memref<1x4x16x4xf32, #tpu.memory_space<vmem>>, vector<1x4x16x4xf32>
    %6 = vector.shape_cast %5 : vector<1x4x16x4xf32> to vector<4x16x4xf32>
    %7 = vector.shape_cast %6 : vector<4x16x4xf32> to vector<64x4xf32>
    %8 = arith.truncf %7 : vector<64x4xf32> to vector<64x4xbf16>
    %cst = arith.constant dense<0.000000e+00> : vector<64x2xf32>
    %9 = tpu.matmul %8, %0, %cst {dimension_numbers = #tpu.dot_dimension_numbers<[1], [0], [0], [1], [0, 0, 1, 1], [], []>} : vector<64x4xbf16>, vector<4x2xbf16>, vector<64x2xf32> -> vector<64x2xf32>
    %10 = vector.broadcast %1 : vector<1x2xf32> to vector<64x2xf32>
    %11 = arith.mulf %9, %10 : vector<64x2xf32>
    %12 = vector.broadcast %2 : vector<1x2xf32> to vector<64x2xf32>
    %13 = arith.addf %11, %12 : vector<64x2xf32>
    %14 = arith.negf %13 : vector<64x2xf32>
    %15 = math.exp %14 : vector<64x2xf32>
    %cst_13 = arith.constant 1.000000e+00 : f32
    %16 = vector.broadcast %cst_13 : f32 to vector<64x2xf32>
    %17 = arith.addf %16, %15 : vector<64x2xf32>
    %18 = arith.divf %16, %17 : vector<64x2xf32>
    %19 = arith.mulf %13, %18 : vector<64x2xf32>
    %20 = vector.shape_cast %19 : vector<64x2xf32> to vector<4x16x2xf32>
    %21 = arith.truncf %20 : vector<4x16x2xf32> to vector<4x16x2xbf16>
    %c1 = arith.constant 1 : index
    %c0_14 = arith.constant 0 : index
    %c0_15 = arith.constant 0 : index
    %22 = vector.load %arg11[%c1, %c0_14, %c0_15] : memref<6x16x2xbf16, #tpu.memory_space<vmem>>, vector<4x16x2xbf16>
    tpu.vector_store %arg11[%c1, %c0_14, %c0_15], %21 {strides = array<i32>} : memref<6x16x2xbf16, #tpu.memory_space<vmem>>, vector<4x16x2xbf16>,
    %c0_16 = arith.constant 0 : index
    %c0_17 = arith.constant 0 : index
    %c0_18 = arith.constant 0 : index
    %c0_19 = arith.constant 0 : index
    %23 = vector.load %arg3[%c0_16, %c0_17, %c0_18, %c0_19] : memref<1x2x16x4xf32, #tpu.memory_space<vmem>>, vector<1x2x16x4xf32>
    %24 = vector.shape_cast %23 : vector<1x2x16x4xf32> to vector<2x16x4xf32>
    %25 = vector.shape_cast %24 : vector<2x16x4xf32> to vector<32x4xf32>
    %26 = arith.truncf %25 : vector<32x4xf32> to vector<32x4xbf16>
    %cst_20 = arith.constant dense<0.000000e+00> : vector<32x2xf32>
    %27 = tpu.matmul %26, %0, %cst_20 {dimension_numbers = #tpu.dot_dimension_numbers<[1], [0], [0], [1], [0, 0, 1, 1], [], []>} : vector<32x4xbf16>, vector<4x2xbf16>, vector<32x2xf32> -> vector<32x2xf32>
    %28 = vector.broadcast %1 : vector<1x2xf32> to vector<32x2xf32>
    %29 = arith.mulf %27, %28 : vector<32x2xf32>
    %30 = vector.broadcast %2 : vector<1x2xf32> to vector<32x2xf32>
    %31 = arith.addf %29, %30 : vector<32x2xf32>
    %32 = arith.negf %31 : vector<32x2xf32>
    %33 = math.exp %32 : vector<32x2xf32>
    %cst_21 = arith.constant 1.000000e+00 : f32
    %34 = vector.broadcast %cst_21 : f32 to vector<32x2xf32>
    %35 = arith.addf %34, %33 : vector<32x2xf32>
    %36 = arith.divf %34, %35 : vector<32x2xf32>
    %37 = arith.mulf %31, %36 : vector<32x2xf32>
    %38 = vector.shape_cast %37 : vector<32x2xf32> to vector<2x16x2xf32>
    %c0_i32 = arith.constant 0 : i32
    %39 = arith.cmpi sgt, %arg1, %c0_i32 : i32
    %cst_22 = arith.constant 1.000000e+00 : f32
    %cst_23 = arith.constant 0.000000e+00 : f32
    %40 = arith.select %39, %cst_22, %cst_23 : f32
    %c3_i32 = arith.constant 3 : i32
    %41 = arith.cmpi slt, %arg1, %c3_i32 : i32
    %cst_24 = arith.constant 1.000000e+00 : f32
    %cst_25 = arith.constant 0.000000e+00 : f32
    %42 = arith.select %41, %cst_24, %cst_25 : f32
    %43 = vector.extract_strided_slice %38 {offsets = [0, 0, 0], sizes = [1, 16, 2], strides = [1, 1, 1]} : vector<2x16x2xf32> to vector<1x16x2xf32>
    %44 = vector.broadcast %40 : f32 to vector<1x16x2xf32>
    %45 = arith.mulf %43, %44 : vector<1x16x2xf32>
    %46 = arith.truncf %45 : vector<1x16x2xf32> to vector<1x16x2xbf16>
    %c0_26 = arith.constant 0 : index
    %c0_27 = arith.constant 0 : index
    %c0_28 = arith.constant 0 : index
    %47 = vector.load %arg11[%c0_26, %c0_27, %c0_28] : memref<6x16x2xbf16, #tpu.memory_space<vmem>>, vector<1x16x2xbf16>
    tpu.vector_store %arg11[%c0_26, %c0_27, %c0_28], %46 {strides = array<i32>} : memref<6x16x2xbf16, #tpu.memory_space<vmem>>, vector<1x16x2xbf16>,
    %48 = vector.extract_strided_slice %38 {offsets = [1, 0, 0], sizes = [1, 16, 2], strides = [1, 1, 1]} : vector<2x16x2xf32> to vector<1x16x2xf32>
    %49 = vector.broadcast %42 : f32 to vector<1x16x2xf32>
    %50 = arith.mulf %48, %49 : vector<1x16x2xf32>
    %51 = arith.truncf %50 : vector<1x16x2xf32> to vector<1x16x2xbf16>
    %c5 = arith.constant 5 : index
    %c0_29 = arith.constant 0 : index
    %c0_30 = arith.constant 0 : index
    %52 = vector.load %arg11[%c5, %c0_29, %c0_30] : memref<6x16x2xbf16, #tpu.memory_space<vmem>>, vector<1x16x2xbf16>
    tpu.vector_store %arg11[%c5, %c0_29, %c0_30], %51 {strides = array<i32>} : memref<6x16x2xbf16, #tpu.memory_space<vmem>>, vector<1x16x2xbf16>,
    %53 = tpu.iota {dimensions = array<i32: 0>} : vector<64x4xi32>
    %c16_i32 = arith.constant 16 : i32
    %c0_i32_31 = arith.constant 0 : i32
    %54 = arith.cmpi eq, %c16_i32, %c0_i32_31 : i32
    %c1_i32 = arith.constant 1 : i32
    %55 = arith.select %54, %c1_i32, %c16_i32 : i32
    %56 = vector.broadcast %55 : i32 to vector<64x4xi32>
    %57 = arith.remsi %53, %56 : vector<64x4xi32>
    %c0_i32_32 = arith.constant 0 : i32
    %58 = vector.broadcast %c0_i32_32 : i32 to vector<64x4xi32>
    %59 = arith.cmpi ne, %57, %58 : vector<64x4xi32>
    %c0_i32_33 = arith.constant 0 : i32
    %60 = vector.broadcast %c0_i32_33 : i32 to vector<64x4xi32>
    %61 = arith.cmpi slt, %57, %60 : vector<64x4xi32>
    %c0_i32_34 = arith.constant 0 : i32
    %62 = arith.cmpi slt, %55, %c0_i32_34 : i32
    %63 = vector.broadcast %62 : i1 to vector<64x4xi1>
    %64 = vector.broadcast %63 : vector<64x4xi1> to vector<64x4xi1>
    %65 = arith.xori %61, %64 : vector<64x4xi1>
    %66 = arith.andi %65, %59 : vector<64x4xi1>
    %67 = vector.broadcast %55 : i32 to vector<64x4xi32>
    %68 = arith.addi %57, %67 : vector<64x4xi32>
    %69 = arith.select %66, %68, %57 : vector<64x4xi1>, vector<64x4xi32>
    %c0_35 = arith.constant 0 : index
    %c0_36 = arith.constant 0 : index
    %c0_37 = arith.constant 0 : index
    %70 = vector.load %arg11[%c0_35, %c0_36, %c0_37] : memref<6x16x2xbf16, #tpu.memory_space<vmem>>, vector<4x16x2xbf16>
    %71 = vector.shape_cast %70 : vector<4x16x2xbf16> to vector<64x2xbf16>
    %c0_38 = arith.constant 0 : index
    %c0_39 = arith.constant 0 : index
    %c0_40 = arith.constant 0 : index
    %72 = vector.load %arg7[%c0_38, %c0_39, %c0_40] : memref<9x2x4xbf16, #tpu.memory_space<vmem>>, vector<1x2x4xbf16>
    %73 = vector.shape_cast %72 : vector<1x2x4xbf16> to vector<2x4xbf16>
    %cst_41 = arith.constant dense<0.000000e+00> : vector<64x4xf32>
    %74 = tpu.matmul %71, %73, %cst_41 {dimension_numbers = #tpu.dot_dimension_numbers<[1], [0], [0], [1], [0, 0, 1, 1], [], []>} : vector<64x2xbf16>, vector<2x4xbf16>, vector<64x4xf32> -> vector<64x4xf32>
    %c1_42 = arith.constant 1 : index
    %c0_43 = arith.constant 0 : index
    %c0_44 = arith.constant 0 : index
    %75 = vector.load %arg11[%c1_42, %c0_43, %c0_44] : memref<6x16x2xbf16, #tpu.memory_space<vmem>>, vector<4x16x2xbf16>
    %76 = vector.shape_cast %75 : vector<4x16x2xbf16> to vector<64x2xbf16>
    %c3 = arith.constant 3 : index
    %c0_45 = arith.constant 0 : index
    %c0_46 = arith.constant 0 : index
    %77 = vector.load %arg7[%c3, %c0_45, %c0_46] : memref<9x2x4xbf16, #tpu.memory_space<vmem>>, vector<1x2x4xbf16>
    %78 = vector.shape_cast %77 : vector<1x2x4xbf16> to vector<2x4xbf16>
    %cst_47 = arith.constant dense<0.000000e+00> : vector<64x4xf32>
    %79 = tpu.matmul %76, %78, %cst_47 {dimension_numbers = #tpu.dot_dimension_numbers<[1], [0], [0], [1], [0, 0, 1, 1], [], []>} : vector<64x2xbf16>, vector<2x4xbf16>, vector<64x4xf32> -> vector<64x4xf32>
    %80 = arith.addf %74, %79 : vector<64x4xf32>
    %c2 = arith.constant 2 : index
    %c0_48 = arith.constant 0 : index
    %c0_49 = arith.constant 0 : index
    %81 = vector.load %arg11[%c2, %c0_48, %c0_49] : memref<6x16x2xbf16, #tpu.memory_space<vmem>>, vector<4x16x2xbf16>
    %82 = vector.shape_cast %81 : vector<4x16x2xbf16> to vector<64x2xbf16>
    %c6 = arith.constant 6 : index
    %c0_50 = arith.constant 0 : index
    %c0_51 = arith.constant 0 : index
    %83 = vector.load %arg7[%c6, %c0_50, %c0_51] : memref<9x2x4xbf16, #tpu.memory_space<vmem>>, vector<1x2x4xbf16>
    %84 = vector.shape_cast %83 : vector<1x2x4xbf16> to vector<2x4xbf16>
    %cst_52 = arith.constant dense<0.000000e+00> : vector<64x4xf32>
    %85 = tpu.matmul %82, %84, %cst_52 {dimension_numbers = #tpu.dot_dimension_numbers<[1], [0], [0], [1], [0, 0, 1, 1], [], []>} : vector<64x2xbf16>, vector<2x4xbf16>, vector<64x4xf32> -> vector<64x4xf32>
    %86 = arith.addf %80, %85 : vector<64x4xf32>
    %c1_i32_53 = arith.constant 1 : i32
    %87 = tpu.dynamic_rotate %86 by %c1_i32_53 dim 0 : vector<64x4xf32>, i32 -> vector<64x4xf32>
    %c0_i32_54 = arith.constant 0 : i32
    %88 = vector.broadcast %c0_i32_54 : i32 to vector<64x4xi32>
    %89 = arith.cmpi eq, %69, %88 : vector<64x4xi32>
    %cst_55 = arith.constant 0.000000e+00 : f32
    %90 = vector.broadcast %cst_55 : f32 to vector<64x4xf32>
    %91 = arith.select %89, %90, %87 : vector<64x4xi1>, vector<64x4xf32>
    %c0_56 = arith.constant 0 : index
    %c0_57 = arith.constant 0 : index
    %c0_58 = arith.constant 0 : index
    %92 = vector.load %arg11[%c0_56, %c0_57, %c0_58] : memref<6x16x2xbf16, #tpu.memory_space<vmem>>, vector<4x16x2xbf16>
    %93 = vector.shape_cast %92 : vector<4x16x2xbf16> to vector<64x2xbf16>
    %c1_59 = arith.constant 1 : index
    %c0_60 = arith.constant 0 : index
    %c0_61 = arith.constant 0 : index
    %94 = vector.load %arg7[%c1_59, %c0_60, %c0_61] : memref<9x2x4xbf16, #tpu.memory_space<vmem>>, vector<1x2x4xbf16>
    %95 = vector.shape_cast %94 : vector<1x2x4xbf16> to vector<2x4xbf16>
    %cst_62 = arith.constant dense<0.000000e+00> : vector<64x4xf32>
    %96 = tpu.matmul %93, %95, %cst_62 {dimension_numbers = #tpu.dot_dimension_numbers<[1], [0], [0], [1], [0, 0, 1, 1], [], []>} : vector<64x2xbf16>, vector<2x4xbf16>, vector<64x4xf32> -> vector<64x4xf32>
    %c1_63 = arith.constant 1 : index
    %c0_64 = arith.constant 0 : index
    %c0_65 = arith.constant 0 : index
    %97 = vector.load %arg11[%c1_63, %c0_64, %c0_65] : memref<6x16x2xbf16, #tpu.memory_space<vmem>>, vector<4x16x2xbf16>
    %98 = vector.shape_cast %97 : vector<4x16x2xbf16> to vector<64x2xbf16>
    %c4 = arith.constant 4 : index
    %c0_66 = arith.constant 0 : index
    %c0_67 = arith.constant 0 : index
    %99 = vector.load %arg7[%c4, %c0_66, %c0_67] : memref<9x2x4xbf16, #tpu.memory_space<vmem>>, vector<1x2x4xbf16>
    %100 = vector.shape_cast %99 : vector<1x2x4xbf16> to vector<2x4xbf16>
    %cst_68 = arith.constant dense<0.000000e+00> : vector<64x4xf32>
    %101 = tpu.matmul %98, %100, %cst_68 {dimension_numbers = #tpu.dot_dimension_numbers<[1], [0], [0], [1], [0, 0, 1, 1], [], []>} : vector<64x2xbf16>, vector<2x4xbf16>, vector<64x4xf32> -> vector<64x4xf32>
    %102 = arith.addf %96, %101 : vector<64x4xf32>
    %c2_69 = arith.constant 2 : index
    %c0_70 = arith.constant 0 : index
    %c0_71 = arith.constant 0 : index
    %103 = vector.load %arg11[%c2_69, %c0_70, %c0_71] : memref<6x16x2xbf16, #tpu.memory_space<vmem>>, vector<4x16x2xbf16>
    %104 = vector.shape_cast %103 : vector<4x16x2xbf16> to vector<64x2xbf16>
    %c7 = arith.constant 7 : index
    %c0_72 = arith.constant 0 : index
    %c0_73 = arith.constant 0 : index
    %105 = vector.load %arg7[%c7, %c0_72, %c0_73] : memref<9x2x4xbf16, #tpu.memory_space<vmem>>, vector<1x2x4xbf16>
    %106 = vector.shape_cast %105 : vector<1x2x4xbf16> to vector<2x4xbf16>
    %cst_74 = arith.constant dense<0.000000e+00> : vector<64x4xf32>
    %107 = tpu.matmul %104, %106, %cst_74 {dimension_numbers = #tpu.dot_dimension_numbers<[1], [0], [0], [1], [0, 0, 1, 1], [], []>} : vector<64x2xbf16>, vector<2x4xbf16>, vector<64x4xf32> -> vector<64x4xf32>
    %108 = arith.addf %102, %107 : vector<64x4xf32>
    %109 = arith.addf %91, %108 : vector<64x4xf32>
    %c0_75 = arith.constant 0 : index
    %c0_76 = arith.constant 0 : index
    %c0_77 = arith.constant 0 : index
    %110 = vector.load %arg11[%c0_75, %c0_76, %c0_77] : memref<6x16x2xbf16, #tpu.memory_space<vmem>>, vector<4x16x2xbf16>
    %111 = vector.shape_cast %110 : vector<4x16x2xbf16> to vector<64x2xbf16>
    %c2_78 = arith.constant 2 : index
    %c0_79 = arith.constant 0 : index
    %c0_80 = arith.constant 0 : index
    %112 = vector.load %arg7[%c2_78, %c0_79, %c0_80] : memref<9x2x4xbf16, #tpu.memory_space<vmem>>, vector<1x2x4xbf16>
    %113 = vector.shape_cast %112 : vector<1x2x4xbf16> to vector<2x4xbf16>
    %cst_81 = arith.constant dense<0.000000e+00> : vector<64x4xf32>
    %114 = tpu.matmul %111, %113, %cst_81 {dimension_numbers = #tpu.dot_dimension_numbers<[1], [0], [0], [1], [0, 0, 1, 1], [], []>} : vector<64x2xbf16>, vector<2x4xbf16>, vector<64x4xf32> -> vector<64x4xf32>
    %c1_82 = arith.constant 1 : index
    %c0_83 = arith.constant 0 : index
    %c0_84 = arith.constant 0 : index
    %115 = vector.load %arg11[%c1_82, %c0_83, %c0_84] : memref<6x16x2xbf16, #tpu.memory_space<vmem>>, vector<4x16x2xbf16>
    %116 = vector.shape_cast %115 : vector<4x16x2xbf16> to vector<64x2xbf16>
    %c5_85 = arith.constant 5 : index
    %c0_86 = arith.constant 0 : index
    %c0_87 = arith.constant 0 : index
    %117 = vector.load %arg7[%c5_85, %c0_86, %c0_87] : memref<9x2x4xbf16, #tpu.memory_space<vmem>>, vector<1x2x4xbf16>
    %118 = vector.shape_cast %117 : vector<1x2x4xbf16> to vector<2x4xbf16>
    %cst_88 = arith.constant dense<0.000000e+00> : vector<64x4xf32>
    %119 = tpu.matmul %116, %118, %cst_88 {dimension_numbers = #tpu.dot_dimension_numbers<[1], [0], [0], [1], [0, 0, 1, 1], [], []>} : vector<64x2xbf16>, vector<2x4xbf16>, vector<64x4xf32> -> vector<64x4xf32>
    %120 = arith.addf %114, %119 : vector<64x4xf32>
    %c2_89 = arith.constant 2 : index
    %c0_90 = arith.constant 0 : index
    %c0_91 = arith.constant 0 : index
    %121 = vector.load %arg11[%c2_89, %c0_90, %c0_91] : memref<6x16x2xbf16, #tpu.memory_space<vmem>>, vector<4x16x2xbf16>
    %122 = vector.shape_cast %121 : vector<4x16x2xbf16> to vector<64x2xbf16>
    %c8 = arith.constant 8 : index
    %c0_92 = arith.constant 0 : index
    %c0_93 = arith.constant 0 : index
    %123 = vector.load %arg7[%c8, %c0_92, %c0_93] : memref<9x2x4xbf16, #tpu.memory_space<vmem>>, vector<1x2x4xbf16>
    %124 = vector.shape_cast %123 : vector<1x2x4xbf16> to vector<2x4xbf16>
    %cst_94 = arith.constant dense<0.000000e+00> : vector<64x4xf32>
    %125 = tpu.matmul %122, %124, %cst_94 {dimension_numbers = #tpu.dot_dimension_numbers<[1], [0], [0], [1], [0, 0, 1, 1], [], []>} : vector<64x2xbf16>, vector<2x4xbf16>, vector<64x4xf32> -> vector<64x4xf32>
    %126 = arith.addf %120, %125 : vector<64x4xf32>
    %c63_i32 = arith.constant 63 : i32
    %127 = tpu.dynamic_rotate %126 by %c63_i32 dim 0 : vector<64x4xf32>, i32 -> vector<64x4xf32>
    %c15_i32 = arith.constant 15 : i32
    %128 = vector.broadcast %c15_i32 : i32 to vector<64x4xi32>
    %129 = arith.cmpi eq, %69, %128 : vector<64x4xi32>
    %cst_95 = arith.constant 0.000000e+00 : f32
    %130 = vector.broadcast %cst_95 : f32 to vector<64x4xf32>
    %131 = arith.select %129, %130, %127 : vector<64x4xi1>, vector<64x4xf32>
    %132 = arith.addf %109, %131 : vector<64x4xf32>
    %133 = vector.broadcast %3 : vector<1x4xf32> to vector<64x4xf32>
    %134 = arith.mulf %132, %133 : vector<64x4xf32>
    %135 = vector.broadcast %4 : vector<1x4xf32> to vector<64x4xf32>
    %136 = arith.addf %134, %135 : vector<64x4xf32>
    %137 = arith.negf %136 : vector<64x4xf32>
    %138 = math.exp %137 : vector<64x4xf32>
    %cst_96 = arith.constant 1.000000e+00 : f32
    %139 = vector.broadcast %cst_96 : f32 to vector<64x4xf32>
    %140 = arith.addf %139, %138 : vector<64x4xf32>
    %141 = arith.divf %139, %140 : vector<64x4xf32>
    %142 = arith.mulf %136, %141 : vector<64x4xf32>
    %143 = vector.shape_cast %6 : vector<4x16x4xf32> to vector<64x4xf32>
    %144 = arith.addf %142, %143 : vector<64x4xf32>
    %145 = vector.shape_cast %144 : vector<64x4xf32> to vector<4x16x4xf32>
    %c0_97 = arith.constant 0 : index
    %c0_98 = arith.constant 0 : index
    %c0_99 = arith.constant 0 : index
    %c0_100 = arith.constant 0 : index
    %146 = vector.load %arg10[%c0_97, %c0_98, %c0_99, %c0_100] : memref<1x4x16x4xf32, #tpu.memory_space<vmem>>, vector<1x4x16x4xf32>
    %147 = vector.shape_cast %146 : vector<1x4x16x4xf32> to vector<4x16x4xf32>
    %148 = vector.shape_cast %145 : vector<4x16x4xf32> to vector<1x4x16x4xf32>
    tpu.vector_store %arg10[%c0_97, %c0_98, %c0_99, %c0_100], %148 {strides = array<i32>} : memref<1x4x16x4xf32, #tpu.memory_space<vmem>>, vector<1x4x16x4xf32>,
    return
  }
  func.func @transform_0(%arg0: i32, %arg1: i32) -> (i32, i32, i32, i32) {
    %c0_i32 = arith.constant 0 : i32
    %c0_i32_0 = arith.constant 0 : i32
    %c0_i32_1 = arith.constant 0 : i32
    return %arg0, %arg1, %c0_i32, %c0_i32_0 : i32, i32, i32, i32
  }
  func.func @transform_1(%arg0: i32, %arg1: i32) -> (i32, i32, i32, i32) {
    %c0_i32 = arith.constant 0 : i32
    %c0_i32_0 = arith.constant 0 : i32
    %c0_i32_1 = arith.constant 0 : i32
    return %arg0, %arg1, %c0_i32, %c0_i32_0 : i32, i32, i32, i32
  }
  func.func @transform_2(%arg0: i32, %arg1: i32) -> (i32, i32) {
    %c0_i32 = arith.constant 0 : i32
    %c0_i32_0 = arith.constant 0 : i32
    %c0_i32_1 = arith.constant 0 : i32
    return %c0_i32, %c0_i32_0 : i32, i32
  }
  func.func @transform_3(%arg0: i32, %arg1: i32) -> (i32, i32) {
    %c0_i32 = arith.constant 0 : i32
    %c0_i32_0 = arith.constant 0 : i32
    %c0_i32_1 = arith.constant 0 : i32
    return %c0_i32, %c0_i32_0 : i32, i32
  }
  func.func @transform_4(%arg0: i32, %arg1: i32) -> (i32, i32) {
    %c0_i32 = arith.constant 0 : i32
    %c0_i32_0 = arith.constant 0 : i32
    %c0_i32_1 = arith.constant 0 : i32
    return %c0_i32, %c0_i32_0 : i32, i32
  }
  func.func @transform_5(%arg0: i32, %arg1: i32) -> (i32, i32, i32) {
    %c0_i32 = arith.constant 0 : i32
    %c0_i32_0 = arith.constant 0 : i32
    %c0_i32_1 = arith.constant 0 : i32
    %c0_i32_2 = arith.constant 0 : i32
    return %c0_i32, %c0_i32_0, %c0_i32_1 : i32, i32, i32
  }
  func.func @transform_6(%arg0: i32, %arg1: i32) -> (i32, i32) {
    %c0_i32 = arith.constant 0 : i32
    %c0_i32_0 = arith.constant 0 : i32
    %c0_i32_1 = arith.constant 0 : i32
    return %c0_i32, %c0_i32_0 : i32, i32
  }
  func.func @transform_7(%arg0: i32, %arg1: i32) -> (i32, i32) {
    %c0_i32 = arith.constant 0 : i32
    %c0_i32_0 = arith.constant 0 : i32
    %c0_i32_1 = arith.constant 0 : i32
    return %c0_i32, %c0_i32_0 : i32, i32
  }
  func.func @transform_8(%arg0: i32, %arg1: i32) -> (i32, i32, i32, i32) {
    %c0_i32 = arith.constant 0 : i32
    %c0_i32_0 = arith.constant 0 : i32
    %c0_i32_1 = arith.constant 0 : i32
    return %arg0, %arg1, %c0_i32, %c0_i32_0 : i32, i32, i32, i32
  }
}

</mosaic_0001>

<llo_original>
// kernel: tpu_custom_call.1
$region0: #{tpu_custom_call.1}
  #allocation0 [shape = 'u32[]', space=smem, size = 0x4, offset = 0x4, fixed_abs, tag = 'smem constant byte address 0x4 - core index']
  #allocation1 [shape = 'u32[144,128]{1,0:T(1,128)}', space=vmem, size = 0x12000, scoped, tag = 'internal scratch']
  #allocation2 [shape = 'bf16[6,16,2]{2,1,0:T(16,128)(2,1)}', space=vmem, size = 0x6000, scoped, tag = 'scratch operand']
  %s0 = inlined_call_operand.vmem [shape: f32[2,16,16,4], index: 0, kind: input, shape index: {}]
  %s1 = inlined_call_operand.vmem [shape: f32[2,8,16,4], index: 1, kind: input, shape index: {}]
  %s2 = inlined_call_operand.vmem [shape: bf16[4,2], index: 2, kind: input, shape index: {}]
  %s3 = inlined_call_operand.vmem [shape: f32[1,2], index: 3, kind: input, shape index: {}]
  %s4 = inlined_call_operand.vmem [shape: f32[1,2], index: 4, kind: input, shape index: {}]
  %s5 = inlined_call_operand.vmem [shape: bf16[9,2,4], index: 5, kind: input, shape index: {}]
  %s6 = inlined_call_operand.vmem [shape: f32[1,4], index: 6, kind: input, shape index: {}]
  %s7 = inlined_call_operand.vmem [shape: f32[1,4], index: 7, kind: input, shape index: {}]
  %s8 = inlined_call_operand.vmem [shape: f32[2,16,16,4], index: 8, kind: output, shape index: {}]
  %s9 = sld [smem:[#allocation0]]
  $region65: #{tpu_custom_call.1} parent=0
    _
  %s11 = ssub.s32 1, %s9
  %s12 = scalar_select 0, %s11, %s9
  loop: start=0, step=1, limit=10
  $region2: #{tpu_custom_call.1} parent=0 // loop_pre_header
    _
  $region3: #{tpu_custom_call.1} parent=0 // loop_header
    %s14 = sphi 0, %s18
    %p15 = scmp.ge.s32.totalorder %s14, 10
    %s21 = sphi 0, %s33
    %s22 = sphi 0, %s29
    %s23 = sphi 0, %s21
    %s24 = sphi 0, %s22
    %s25 = sphi 0, %s23
    %s26 = sphi 0, %s24
    %s38 = sphi 0, %s40
    %s41 = sphi 0, %s38
    %s42 = sphi 0, %s41
    %s58 = sphi 0, %s42
    %s66 = sphi 0, %s68
    %s69 = sphi 0, %s66
    %s70 = sphi 0, %s69
    %s86 = sphi 0, %s70
    %s90 = sphi 0, %s90
    %s92 = sphi 0, %s90
    %s93 = sphi 0, %s92
    %s107 = sphi 0, %s93
    %s111 = sphi 0, %s111
    %s113 = sphi 0, %s111
    %s114 = sphi 0, %s113
    %s128 = sphi 0, %s114
    %s132 = sphi 0, %s132
    %s134 = sphi 0, %s132
    %s135 = sphi 0, %s134
    %s149 = sphi 0, %s135
    %s153 = sphi 0, %s153
    %s155 = sphi 0, %s153
    %s156 = sphi 0, %s155
    %s170 = sphi 0, %s156
    %s174 = sphi 0, %s174
    %s176 = sphi 0, %s174
    %s177 = sphi 0, %s176
    %s191 = sphi 0, %s177
    %s195 = sphi 0, %s195
    %s197 = sphi 0, %s195
    %s198 = sphi 0, %s197
    %s212 = sphi 0, %s198
    %s220 = sphi 0, %s222
    %s223 = sphi 0, %s220
    %s224 = sphi 0, %s223
    %s240 = sphi 0, %s224
  $region4: #{tpu_custom_call.1} parent=0 // loop_header_branch
    %17 = sbr.rel (%p15) target = $region8
  $region5: #{tpu_custom_call.1} parent=0 // loop_body
    %s19 = ssub.s32 %s14, 1
    %s20 = ssub.s32 %s14, 2
    %s27 = sadd.s32 1, %s22
    %p28 = scmp.ge.s32.totalorder %s27, 4
    %s29 = scalar_select %p28, 0, %s27
    %s30 = sadd.s32 1, %s21
    %s31 = scalar_select %p28, %s30, %s21
    %p32 = scmp.ge.s32.totalorder %s31, 2
    %s33 = scalar_select %p32, 0, %s31
    %s34 = ssub.s32 %s21, %s33
    %s35 = ssub.s32 %s22, %s29
    %s36 = sor.u32 %s34, %s35
    %p37 = scmp.eq.s32.totalorder %s36, 0
    %s39 = sadd.s32 %s38, 1
    %s40 = scalar_select %p37, %s38, %s39
    %p43 = pneg %p37
    %p44 = scmp.eq.s32.totalorder %s14, 7
    %p45 = por %p43, %p44
    %p46 = scmp.ne.s32.totalorder %s38, %s41
    %p47 = scmp.eq.s32.totalorder %s14, 0
    %p48 = por %p46, %p47
    %p49 = scmp.ne.s32.totalorder %s38, %s41
    %p50 = scmp.eq.s32.totalorder %s19, 7
    %p51 = por %p49, %p50
    %p52 = scmp.ne.s32.totalorder %s41, %s42
    %p53 = scmp.eq.s32.totalorder %s19, 0
    %p54 = por %p52, %p53
    %p55 = scmp.ne.s32.totalorder %s41, %s42
    %p56 = scmp.eq.s32.totalorder %s20, 7
    %p57 = por %p55, %p56
    %p59 = scmp.ne.s32.totalorder %s42, %s58
    %p60 = scmp.eq.s32.totalorder %s20, 0
    %p61 = por %p59, %p60
    %s62 = ssub.s32 %s21, %s33
    %s63 = ssub.s32 %s22, %s29
    %s64 = sor.u32 %s62, %s63
    %p65 = scmp.eq.s32.totalorder %s64, 0
    %s67 = sadd.s32 %s66, 1
    %s68 = scalar_select %p65, %s66, %s67
    %p71 = pneg %p65
    %p72 = scmp.eq.s32.totalorder %s14, 7
    %p73 = por %p71, %p72
    %p74 = scmp.ne.s32.totalorder %s66, %s69
    %p75 = scmp.eq.s32.totalorder %s14, 0
    %p76 = por %p74, %p75
    %p77 = scmp.ne.s32.totalorder %s66, %s69
    %p78 = scmp.eq.s32.totalorder %s19, 7
    %p79 = por %p77, %p78
    %p80 = scmp.ne.s32.totalorder %s69, %s70
    %p81 = scmp.eq.s32.totalorder %s19, 0
    %p82 = por %p80, %p81
    %p83 = scmp.ne.s32.totalorder %s69, %s70
    %p84 = scmp.eq.s32.totalorder %s20, 7
    %p85 = por %p83, %p84
    %p87 = scmp.ne.s32.totalorder %s70, %s86
    %p88 = scmp.eq.s32.totalorder %s20, 0
    %p89 = por %p87, %p88
    %s91 = sadd.s32 %s90, 1
    %p94 = scmp.eq.s32.totalorder %s14, 7
    %p95 = scmp.ne.s32.totalorder %s90, %s92
    %p96 = scmp.eq.s32.totalorder %s14, 0
    %p97 = por %p95, %p96
    %p98 = scmp.ne.s32.totalorder %s90, %s92
    %p99 = scmp.eq.s32.totalorder %s19, 7
    %p100 = por %p98, %p99
    %p101 = scmp.ne.s32.totalorder %s92, %s93
    %p102 = scmp.eq.s32.totalorder %s19, 0
    %p103 = por %p101, %p102
    %p104 = scmp.ne.s32.totalorder %s92, %s93
    %p105 = scmp.eq.s32.totalorder %s20, 7
    %p106 = por %p104, %p105
    %p108 = scmp.ne.s32.totalorder %s93, %s107
    %p109 = scmp.eq.s32.totalorder %s20, 0
    %p110 = por %p108, %p109
    %s112 = sadd.s32 %s111, 1
    %p115 = scmp.eq.s32.totalorder %s14, 7
    %p116 = scmp.ne.s32.totalorder %s111, %s113
    %p117 = scmp.eq.s32.totalorder %s14, 0
    %p118 = por %p116, %p117
    %p119 = scmp.ne.s32.totalorder %s111, %s113
    %p120 = scmp.eq.s32.totalorder %s19, 7
    %p121 = por %p119, %p120
    %p122 = scmp.ne.s32.totalorder %s113, %s114
    %p123 = scmp.eq.s32.totalorder %s19, 0
    %p124 = por %p122, %p123
    %p125 = scmp.ne.s32.totalorder %s113, %s114
    %p126 = scmp.eq.s32.totalorder %s20, 7
    %p127 = por %p125, %p126
    %p129 = scmp.ne.s32.totalorder %s114, %s128
    %p130 = scmp.eq.s32.totalorder %s20, 0
    %p131 = por %p129, %p130
    %s133 = sadd.s32 %s132, 1
    %p136 = scmp.eq.s32.totalorder %s14, 7
    %p137 = scmp.ne.s32.totalorder %s132, %s134
    %p138 = scmp.eq.s32.totalorder %s14, 0
    %p139 = por %p137, %p138
    %p140 = scmp.ne.s32.totalorder %s132, %s134
    %p141 = scmp.eq.s32.totalorder %s19, 7
    %p142 = por %p140, %p141
    %p143 = scmp.ne.s32.totalorder %s134, %s135
    %p144 = scmp.eq.s32.totalorder %s19, 0
    %p145 = por %p143, %p144
    %p146 = scmp.ne.s32.totalorder %s134, %s135
    %p147 = scmp.eq.s32.totalorder %s20, 7
    %p148 = por %p146, %p147
    %p150 = scmp.ne.s32.totalorder %s135, %s149
    %p151 = scmp.eq.s32.totalorder %s20, 0
    %p152 = por %p150, %p151
    %s154 = sadd.s32 %s153, 1
    %p157 = scmp.eq.s32.totalorder %s14, 7
    %p158 = scmp.ne.s32.totalorder %s153, %s155
    %p159 = scmp.eq.s32.totalorder %s14, 0
    %p160 = por %p158, %p159
    %p161 = scmp.ne.s32.totalorder %s153, %s155
    %p162 = scmp.eq.s32.totalorder %s19, 7
    %p163 = por %p161, %p162
    %p164 = scmp.ne.s32.totalorder %s155, %s156
    %p165 = scmp.eq.s32.totalorder %s19, 0
    %p166 = por %p164, %p165
    %p167 = scmp.ne.s32.totalorder %s155, %s156
    %p168 = scmp.eq.s32.totalorder %s20, 7
    %p169 = por %p167, %p168
    %p171 = scmp.ne.s32.totalorder %s156, %s170
    %p172 = scmp.eq.s32.totalorder %s20, 0
    %p173 = por %p171, %p172
    %s175 = sadd.s32 %s174, 1
    %p178 = scmp.eq.s32.totalorder %s14, 7
    %p179 = scmp.ne.s32.totalorder %s174, %s176
    %p180 = scmp.eq.s32.totalorder %s14, 0
    %p181 = por %p179, %p180
    %p182 = scmp.ne.s32.totalorder %s174, %s176
    %p183 = scmp.eq.s32.totalorder %s19, 7
    %p184 = por %p182, %p183
    %p185 = scmp.ne.s32.totalorder %s176, %s177
    %p186 = scmp.eq.s32.totalorder %s19, 0
    %p187 = por %p185, %p186
    %p188 = scmp.ne.s32.totalorder %s176, %s177
    %p189 = scmp.eq.s32.totalorder %s20, 7
    %p190 = por %p188, %p189
    %p192 = scmp.ne.s32.totalorder %s177, %s191
    %p193 = scmp.eq.s32.totalorder %s20, 0
    %p194 = por %p192, %p193
    %s196 = sadd.s32 %s195, 1
    %p199 = scmp.eq.s32.totalorder %s14, 7
    %p200 = scmp.ne.s32.totalorder %s195, %s197
    %p201 = scmp.eq.s32.totalorder %s14, 0
    %p202 = por %p200, %p201
    %p203 = scmp.ne.s32.totalorder %s195, %s197
    %p204 = scmp.eq.s32.totalorder %s19, 7
    %p205 = por %p203, %p204
    %p206 = scmp.ne.s32.totalorder %s197, %s198
    %p207 = scmp.eq.s32.totalorder %s19, 0
    %p208 = por %p206, %p207
    %p209 = scmp.ne.s32.totalorder %s197, %s198
    %p210 = scmp.eq.s32.totalorder %s20, 7
    %p211 = por %p209, %p210
    %p213 = scmp.ne.s32.totalorder %s198, %s212
    %p214 = scmp.eq.s32.totalorder %s20, 0
    %p215 = por %p213, %p214
    %s216 = ssub.s32 %s21, %s33
    %s217 = ssub.s32 %s22, %s29
    %s218 = sor.u32 %s216, %s217
    %p219 = scmp.eq.s32.totalorder %s218, 0
    %s221 = sadd.s32 %s220, 1
    %s222 = scalar_select %p219, %s220, %s221
    %p225 = pneg %p219
    %p226 = scmp.eq.s32.totalorder %s14, 7
    %p227 = por %p225, %p226
    %p228 = scmp.ne.s32.totalorder %s220, %s223
    %p229 = scmp.eq.s32.totalorder %s14, 0
    %p230 = por %p228, %p229
    %p231 = scmp.ne.s32.totalorder %s220, %s223
    %p232 = scmp.eq.s32.totalorder %s19, 7
    %p233 = por %p231, %p232
    %p234 = scmp.ne.s32.totalorder %s223, %s224
    %p235 = scmp.eq.s32.totalorder %s19, 0
    %p236 = por %p234, %p235
    %p237 = scmp.ne.s32.totalorder %s223, %s224
    %p238 = scmp.eq.s32.totalorder %s20, 7
    %p239 = por %p237, %p238
    %p241 = scmp.ne.s32.totalorder %s224, %s240
    %p242 = scmp.eq.s32.totalorder %s20, 0
    %p243 = por %p241, %p242
    %p244 = scmp.le.s32.totalorder 1, %s14
    %p245 = scmp.lt.s32.totalorder %s14, 9
    %p246 = pnand %p244, %p245
    %p247 = pneg %p246
    // Predicated region
    $region9: #{tpu_custom_call.1} parent=5 // pred_check
      _
    $region10: #{tpu_custom_call.1} parent=5 // pred_check_branch
      %249 = sbr.rel (%p246) target = $region12
    $region11: #{tpu_custom_call.1} parent=5 // pred_region
      %s250 = ssub.s32 %s14, 1
      // Predicated region
      $region13: #{tpu_custom_call.1} parent=11 // pred_check
        %p251 = pneg %p103
      $region14: #{tpu_custom_call.1} parent=11 // pred_check_branch
        %253 = sbr.rel (%p251) target = $region16
      $region15: #{tpu_custom_call.1} parent=11 // pred_region
        _
      $region16: #{tpu_custom_call.1} parent=11 // pred_fallthru
        _
      // Predicated region
      $region17: #{tpu_custom_call.1} parent=11 // pred_check
        %p254 = pneg %p124
      $region18: #{tpu_custom_call.1} parent=11 // pred_check_branch
        %256 = sbr.rel (%p254) target = $region20
      $region19: #{tpu_custom_call.1} parent=11 // pred_region
        _
      $region20: #{tpu_custom_call.1} parent=11 // pred_fallthru
        _
      // Predicated region
      $region21: #{tpu_custom_call.1} parent=11 // pred_check
        %p257 = pneg %p145
      $region22: #{tpu_custom_call.1} parent=11 // pred_check_branch
        %259 = sbr.rel (%p257) target = $region24
      $region23: #{tpu_custom_call.1} parent=11 // pred_region
        _
      $region24: #{tpu_custom_call.1} parent=11 // pred_fallthru
        _
      // Predicated region
      $region25: #{tpu_custom_call.1} parent=11 // pred_check
        %p260 = pneg %p166
      $region26: #{tpu_custom_call.1} parent=11 // pred_check_branch
        %262 = sbr.rel (%p260) target = $region28
      $region27: #{tpu_custom_call.1} parent=11 // pred_region
        _
      $region28: #{tpu_custom_call.1} parent=11 // pred_fallthru
        _
      // Predicated region
      $region29: #{tpu_custom_call.1} parent=11 // pred_check
        %p263 = pneg %p187
      $region30: #{tpu_custom_call.1} parent=11 // pred_check_branch
        %265 = sbr.rel (%p263) target = $region32
      $region31: #{tpu_custom_call.1} parent=11 // pred_region
        _
      $region32: #{tpu_custom_call.1} parent=11 // pred_fallthru
        _
      // Predicated region
      $region33: #{tpu_custom_call.1} parent=11 // pred_check
        %p266 = pneg %p208
      $region34: #{tpu_custom_call.1} parent=11 // pred_check_branch
        %268 = sbr.rel (%p266) target = $region36
      $region35: #{tpu_custom_call.1} parent=11 // pred_region
        _
      $region36: #{tpu_custom_call.1} parent=11 // pred_fallthru
        _
    $region12: #{tpu_custom_call.1} parent=5 // pred_fallthru
      _
    %p269 = scmp.lt.s32.totalorder %s14, 8
    // Predicated region
    $region37: #{tpu_custom_call.1} parent=5 // pred_check
      %p270 = pneg %p269
    $region38: #{tpu_custom_call.1} parent=5 // pred_check_branch
      %272 = sbr.rel (%p270) target = $region40
    $region39: #{tpu_custom_call.1} parent=5 // pred_region
      // Predicated region
      $region41: #{tpu_custom_call.1} parent=39 // pred_check
        %p273 = pneg %p48
      $region42: #{tpu_custom_call.1} parent=39 // pred_check_branch
        %275 = sbr.rel (%p273) target = $region44
      $region43: #{tpu_custom_call.1} parent=39 // pred_region
        %s276 = smul.u32 4, %s22
        %p277 = scmp.lt.s32.totalorder %s21, 1
        %s278 = scalar_select %p277, %s21, 1
        %p279 = scmp.lt.s32.totalorder %s276, 15
        %s280 = scalar_select %p279, %s276, 15
        %s281 = smul.addr %s280, 2
        %s282 = smul.addr %s278, 32
        %s283 = sadd.s32 %s281, %s282
        %s284 = smul.addr %s283, 8
        %s285 = scalar_lea.vmem %s0, %s284
        %s286 = smul.u32 4, %s22
      $region44: #{tpu_custom_call.1} parent=39 // pred_fallthru
        _
      // Predicated region
      $region45: #{tpu_custom_call.1} parent=39 // pred_check
        %p287 = pneg %p76
      $region46: #{tpu_custom_call.1} parent=39 // pred_check_branch
        %289 = sbr.rel (%p287) target = $region48
      $region47: #{tpu_custom_call.1} parent=39 // pred_region
        %s290 = smul.u32 2, %s22
        %p291 = scmp.lt.s32.totalorder %s21, 1
        %s292 = scalar_select %p291, %s21, 1
        %p293 = scmp.lt.s32.totalorder %s290, 7
        %s294 = scalar_select %p293, %s290, 7
        %s295 = smul.addr %s294, 2
        %s296 = smul.addr %s292, 16
        %s297 = sadd.s32 %s295, %s296
        %s298 = smul.addr %s297, 8
        %s299 = scalar_lea.vmem %s1, %s298
        %s300 = smul.u32 2, %s22
      $region48: #{tpu_custom_call.1} parent=39 // pred_fallthru
        _
    $region40: #{tpu_custom_call.1} parent=5 // pred_fallthru
      _
    %p301 = scmp.le.s32.totalorder 1, %s14
    %p302 = scmp.lt.s32.totalorder %s14, 9
    %p303 = pnand %p301, %p302
    %p304 = pneg %p303
    // Predicated region
    $region49: #{tpu_custom_call.1} parent=5 // pred_check
      _
    $region50: #{tpu_custom_call.1} parent=5 // pred_check_branch
      %306 = sbr.rel (%p303) target = $region52
    $region51: #{tpu_custom_call.1} parent=5 // pred_region
      %s307 = ssub.s32 %s14, 1
      %s308 = smul.u32 4, %s24
      %p309 = scmp.lt.s32.totalorder %s23, 1
      %s310 = scalar_select %p309, %s23, 1
      %p311 = scmp.lt.s32.totalorder %s308, 15
      %s312 = scalar_select %p311, %s308, 15
      %s313 = smul.addr %s312, 2
      %s314 = smul.addr %s310, 32
      %s315 = sadd.s32 %s313, %s314
      %s316 = smul.addr %s315, 8
      %s317 = scalar_lea.vmem %s0, %s316
      %p318 = pneg %p54
      %p319 = pneg %p51
      %s320 = smul.u32 2, %s24
      %p321 = scmp.lt.s32.totalorder %s23, 1
      %s322 = scalar_select %p321, %s23, 1
      %p323 = scmp.lt.s32.totalorder %s320, 7
      %s324 = scalar_select %p323, %s320, 7
      %s325 = smul.addr %s324, 2
      %s326 = smul.addr %s322, 16
      %s327 = sadd.s32 %s325, %s326
      %s328 = smul.addr %s327, 8
      %s329 = scalar_lea.vmem %s1, %s328
      %p330 = pneg %p82
      %p331 = pneg %p79
      %p332 = pneg %p103
      %p333 = pneg %p100
      %p334 = pneg %p124
      %p335 = pneg %p121
      %p336 = pneg %p145
      %p337 = pneg %p142
      %p338 = pneg %p166
      %p339 = pneg %p163
      %p340 = pneg %p187
      %p341 = pneg %p184
      %p342 = pneg %p208
      %p343 = pneg %p205
      %p344 = pneg %p236
      %p345 = pneg %p233
      %s346 = smul.u32 4, %s24
      %p347 = scmp.lt.s32.totalorder %s23, 1
      %s348 = scalar_select %p347, %s23, 1
      %p349 = scmp.lt.s32.totalorder %s346, 15
      %s350 = scalar_select %p349, %s346, 15
      %s351 = smul.addr %s350, 2
      %s352 = smul.addr %s348, 32
      %s353 = sadd.s32 %s351, %s352
      %s354 = smul.addr %s353, 8
      %s355 = scalar_lea.vmem %s8, %s354
      %s356 = smul.u32 4, %s24
      %p357 = scmp.lt.s32.totalorder %s23, 1
      %s358 = scalar_select %p357, %s23, 1
      %p359 = scmp.lt.s32.totalorder %s356, 15
      %s360 = scalar_select %p359, %s356, 15
      %s361 = smul.addr %s360, 2
      %s362 = smul.addr %s358, 32
      %s363 = sadd.s32 %s361, %s362
      %s364 = smul.addr %s363, 8
      %s365 = scalar_lea.vmem %s0, %s364
      %s366 = smul.u32 4, %s24
      %s367 = smul.u32 2, %s24
      %p368 = scmp.lt.s32.totalorder %s23, 1
      %s369 = scalar_select %p368, %s23, 1
      %p370 = scmp.lt.s32.totalorder %s367, 7
      %s371 = scalar_select %p370, %s367, 7
      %s372 = smul.addr %s371, 2
      %s373 = smul.addr %s369, 16
      %s374 = sadd.s32 %s372, %s373
      %s375 = smul.addr %s374, 8
      %s376 = scalar_lea.vmem %s1, %s375
      %s377 = smul.u32 2, %s24
      %s378 = smul.u32 4, %s24
      %p379 = scmp.lt.s32.totalorder %s23, 1
      %s380 = scalar_select %p379, %s23, 1
      %p381 = scmp.lt.s32.totalorder %s378, 15
      %s382 = scalar_select %p381, %s378, 15
      %s383 = smul.addr %s382, 2
      %s384 = smul.addr %s380, 32
      %s385 = sadd.s32 %s383, %s384
      %s386 = smul.addr %s385, 8
      %s387 = scalar_lea.vmem %s8, %s386
      %s388 = smul.u32 4, %s24
      %v390 = vld [vmem:[%s2] sm:$0x3]
      %v391 = vld [vmem:[%s3] sm:$0x1]
      %v392 = vld [vmem:[%s4] sm:$0x1]
      %v393 = vld [vmem:[%s6] sm:$0x1]
      %v394 = vld [vmem:[%s7] sm:$0x1]
      %v395 = vld [vmem:[%s365] sm:$0xff]
      %v396 = vld [vmem:[%s365 + $0x8] sm:$0xff]
      %v397 = vld [vmem:[%s365 + $0x10] sm:$0xff]
      %v398 = vld [vmem:[%s365 + $0x18] sm:$0xff]
      %v399 = vld [vmem:[%s365 + $0x20] sm:$0xff]
      %v400 = vld [vmem:[%s365 + $0x28] sm:$0xff]
      %v401 = vld [vmem:[%s365 + $0x30] sm:$0xff]
      %v402 = vld [vmem:[%s365 + $0x38] sm:$0xff]
      %v403 = vpack.c.bf16 %v396, %v395
      %v404 = vpack.c.bf16 %v398, %v397
      %v405 = vpack.c.bf16 %v400, %v399
      %v406 = vpack.c.bf16 %v402, %v401
      %vm407 = vcmask 31744
      %v409 = vsel %vm407, %v403, 0
      %v412 = vsel %vm407, %v404, 0
      %v415 = vsel %vm407, %v405, 0
      %v418 = vsel %vm407, %v406, 0
      %vm420 = vcmask 1041408
      %v422 = vsel %vm420, %v390, 0
      %424 = vmatprep.subr.bf16.mxu0 0
      %425 = vmatpush1.bf16.msra.mxu0 %v422
      %426 = vmatprep.subr.bf16.mxu0 0
      %427 = vmatpush1.bf16.msra.mxu0 0
      %428 = vmatprep.subr.bf16.mxu0 0
      %429 = vmatpush1.bf16.msra.mxu0 0
      %430 = vmatprep.subr.bf16.mxu0 0
      %431 = vmatpush1.bf16.msra.mxu0 0
      %432 = vmatprep.subr.bf16.mxu0 0
      %433 = vmatpush1.bf16.msra.mxu0 0
      %434 = vmatprep.subr.bf16.mxu0 0
      %435 = vmatpush1.bf16.msra.mxu0 0
      %436 = vmatprep.subr.bf16.mxu0 0
      %437 = vmatpush1.bf16.msra.mxu0 0
      %438 = vmatprep.subr.bf16.mxu0 0
      %439 = vmatpush1.bf16.msra.mxu0 0
      %440 = vmatprep.subr.bf16.mxu0 0
      %441 = vmatpush1.bf16.msra.mxu0 0
      %442 = vmatprep.subr.bf16.mxu0 0
      %443 = vmatpush1.bf16.msra.mxu0 0
      %444 = vmatprep.subr.bf16.mxu0 0
      %445 = vmatpush1.bf16.msra.mxu0 0
      %446 = vmatprep.subr.bf16.mxu0 0
      %447 = vmatpush1.bf16.msra.mxu0 0
      %448 = vmatprep.subr.bf16.mxu0 0
      %449 = vmatpush1.bf16.msra.mxu0 0
      %450 = vmatprep.subr.bf16.mxu0 0
      %451 = vmatpush1.bf16.msra.mxu0 0
      %452 = vmatprep.subr.bf16.mxu0 0
      %453 = vmatpush1.bf16.msra.mxu0 0
      %454 = vmatprep.subr.bf16.mxu0 0
      %455 = vmatpush1.bf16.msra.mxu0 0
      %456 = vmatprep.mubr.bf16.mxu0 0
      %457 = vmatmul.mubr.bf16.gmra.mrb[0].mxu0 %v409
      %v458 = vpop.f32.mrb[0].mxu0
      %v459 = vadd.f32 0.0, %v458
      %v460 = vpop.f32.mrb[0].mxu0
      %v461 = vpop.f32.mrb[0].mxu0
      %v462 = vadd.f32 0.0, %v461
      %v463 = vpop.f32.mrb[0].mxu0
      %464 = vmatprep.mubr.bf16.mxu0 0
      %465 = vmatmul.mubr.bf16.gmra.mrb[0].mxu0 %v412
      %v466 = vpop.f32.mrb[0].mxu0
      %v467 = vadd.f32 0.0, %v466
      %v468 = vpop.f32.mrb[0].mxu0
      %v469 = vpop.f32.mrb[0].mxu0
      %v470 = vadd.f32 0.0, %v469
      %v471 = vpop.f32.mrb[0].mxu0
      %472 = vmatprep.mubr.bf16.mxu0 0
      %473 = vmatmul.mubr.bf16.gmra.mrb[0].mxu0 %v415
      %v474 = vpop.f32.mrb[0].mxu0
      %v475 = vadd.f32 0.0, %v474
      %v476 = vpop.f32.mrb[0].mxu0
      %v477 = vpop.f32.mrb[0].mxu0
      %v478 = vadd.f32 0.0, %v477
      %v479 = vpop.f32.mrb[0].mxu0
      %480 = vmatprep.mubr.bf16.mxu0 0
      %481 = vmatmul.mubr.bf16.gmra.mrb[0].mxu0 %v418
      %v482 = vpop.f32.mrb[0].mxu0
      %v483 = vadd.f32 0.0, %v482
      %v484 = vpop.f32.mrb[0].mxu0
      %v485 = vpop.f32.mrb[0].mxu0
      %v486 = vadd.f32 0.0, %v485
      %v487 = vpop.f32.mrb[0].mxu0
      %488 = vdwg.mxu0
      %v490 = vlaneseq
      %v491 = vshrl.u32 %v490, 7
      %v492 = vsub.s32 0, %v491
      %v493 = vrot.slane %v391, %v492
      %v495 = vmul.f32 %v459, %v493
      %v496 = vmul.f32 %v462, %v493
      %v497 = vmul.f32 %v467, %v493
      %v498 = vmul.f32 %v470, %v493
      %v499 = vmul.f32 %v475, %v493
      %v500 = vmul.f32 %v478, %v493
      %v501 = vmul.f32 %v483, %v493
      %v502 = vmul.f32 %v486, %v493
      %v504 = vlaneseq
      %v505 = vshrl.u32 %v504, 7
      %v506 = vsub.s32 0, %v505
      %v507 = vrot.slane %v392, %v506
      %v509 = vadd.f32 %v495, %v507
      %v510 = vadd.f32 %v496, %v507
      %v511 = vadd.f32 %v497, %v507
      %v512 = vadd.f32 %v498, %v507
      %v513 = vadd.f32 %v499, %v507
      %v514 = vadd.f32 %v500, %v507
      %v515 = vadd.f32 %v501, %v507
      %v516 = vadd.f32 %v502, %v507
      %v517 = vxor.u32 %v509, 2147483648
      %v518 = vxor.u32 %v510, 2147483648
      %v519 = vxor.u32 %v511, 2147483648
      %v520 = vxor.u32 %v512, 2147483648
      %v521 = vxor.u32 %v513, 2147483648
      %v522 = vxor.u32 %v514, 2147483648
      %v523 = vxor.u32 %v515, 2147483648
      %v524 = vxor.u32 %v516, 2147483648
      %v525 = vmul.f32 %v517, 1.442695
      %v526 = vpow.pop %v525
      %v527 = vmul.f32 %v518, 1.442695
      %v528 = vpow.pop %v527
      %v529 = vmul.f32 %v519, 1.442695
      %v530 = vpow.pop %v529
      %v531 = vmul.f32 %v520, 1.442695
      %v532 = vpow.pop %v531
      %v533 = vmul.f32 %v521, 1.442695
      %v534 = vpow.pop %v533
      %v535 = vmul.f32 %v522, 1.442695
      %v536 = vpow.pop %v535
      %v537 = vmul.f32 %v523, 1.442695
      %v538 = vpow.pop %v537
      %v539 = vmul.f32 %v524, 1.442695
      %v540 = vpow.pop %v539
      %v541 = vadd.f32 %v526, 1.0
      %v542 = vadd.f32 %v528, 1.0
      %v543 = vadd.f32 %v530, 1.0
      %v544 = vadd.f32 %v532, 1.0
      %v545 = vadd.f32 %v534, 1.0
      %v546 = vadd.f32 %v536, 1.0
      %v547 = vadd.f32 %v538, 1.0
      %v548 = vadd.f32 %v540, 1.0
      %v549 = vrcp.pop %v541
      %v550 = vmul.f32 1.0, %v549
      %v551 = vrcp.pop %v542
      %v552 = vmul.f32 1.0, %v551
      %v553 = vrcp.pop %v543
      %v554 = vmul.f32 1.0, %v553
      %v555 = vrcp.pop %v544
      %v556 = vmul.f32 1.0, %v555
      %v557 = vrcp.pop %v545
      %v558 = vmul.f32 1.0, %v557
      %v559 = vrcp.pop %v546
      %v560 = vmul.f32 1.0, %v559
      %v561 = vrcp.pop %v547
      %v562 = vmul.f32 1.0, %v561
      %v563 = vrcp.pop %v548
      %v564 = vmul.f32 1.0, %v563
      %v565 = vmul.f32 %v509, %v550
      %v566 = vmul.f32 %v510, %v552
      %v567 = vmul.f32 %v511, %v554
      %v568 = vmul.f32 %v512, %v556
      %v569 = vmul.f32 %v513, %v558
      %v570 = vmul.f32 %v514, %v560
      %v571 = vmul.f32 %v515, %v562
      %v572 = vmul.f32 %v516, %v564
      %v573 = vpack.c.bf16 %v566, %v565
      %v574 = vpack.c.bf16 %v568, %v567
      %v575 = vpack.c.bf16 %v570, %v569
      %v576 = vpack.c.bf16 %v572, %v571
      %s577 = scalar_lea.vmem [#allocation2], 8
      %vm578 = vcmask 15360
      %579 = vst.msk [vmem:[%s577] sm:$0xff] %vm578, %v573
      %580 = vst.msk [vmem:[%s577 + $0x8] sm:$0xff] %vm578, %v574
      %581 = vst.msk [vmem:[%s577 + $0x10] sm:$0xff] %vm578, %v575
      %582 = vst.msk [vmem:[%s577 + $0x18] sm:$0xff] %vm578, %v576
      %v583 = vld [vmem:[%s376] sm:$0xff]
      %v584 = vld [vmem:[%s376 + $0x8] sm:$0xff]
      %v585 = vld [vmem:[%s376 + $0x10] sm:$0xff]
      %v586 = vld [vmem:[%s376 + $0x18] sm:$0xff]
      %v587 = vpack.c.bf16 %v584, %v583
      %v588 = vpack.c.bf16 %v586, %v585
      %v590 = vsel %vm407, %v587, 0
      %v593 = vsel %vm407, %v588, 0
      %595 = vmatprep.subr.bf16.mxu0 0
      %596 = vmatpush1.bf16.msra.mxu0 %v422
      %597 = vmatprep.subr.bf16.mxu0 0
      %598 = vmatpush1.bf16.msra.mxu0 0
      %599 = vmatprep.subr.bf16.mxu0 0
      %600 = vmatpush1.bf16.msra.mxu0 0
      %601 = vmatprep.subr.bf16.mxu0 0
      %602 = vmatpush1.bf16.msra.mxu0 0
      %603 = vmatprep.subr.bf16.mxu0 0
      %604 = vmatpush1.bf16.msra.mxu0 0
      %605 = vmatprep.subr.bf16.mxu0 0
      %606 = vmatpush1.bf16.msra.mxu0 0
      %607 = vmatprep.subr.bf16.mxu0 0
      %608 = vmatpush1.bf16.msra.mxu0 0
      %609 = vmatprep.subr.bf16.mxu0 0
      %610 = vmatpush1.bf16.msra.mxu0 0
      %611 = vmatprep.subr.bf16.mxu0 0
      %612 = vmatpush1.bf16.msra.mxu0 0
      %613 = vmatprep.subr.bf16.mxu0 0
      %614 = vmatpush1.bf16.msra.mxu0 0
      %615 = vmatprep.subr.bf16.mxu0 0
      %616 = vmatpush1.bf16.msra.mxu0 0
      %617 = vmatprep.subr.bf16.mxu0 0
      %618 = vmatpush1.bf16.msra.mxu0 0
      %619 = vmatprep.subr.bf16.mxu0 0
      %620 = vmatpush1.bf16.msra.mxu0 0
      %621 = vmatprep.subr.bf16.mxu0 0
      %622 = vmatpush1.bf16.msra.mxu0 0
      %623 = vmatprep.subr.bf16.mxu0 0
      %624 = vmatpush1.bf16.msra.mxu0 0
      %625 = vmatprep.subr.bf16.mxu0 0
      %626 = vmatpush1.bf16.msra.mxu0 0
      %627 = vmatprep.mubr.bf16.mxu0 0
      %628 = vmatmul.mubr.bf16.gmra.mrb[0].mxu0 %v590
      %v629 = vpop.f32.mrb[0].mxu0
      %v630 = vadd.f32 0.0, %v629
      %v631 = vpop.f32.mrb[0].mxu0
      %v632 = vpop.f32.mrb[0].mxu0
      %v633 = vadd.f32 0.0, %v632
      %v634 = vpop.f32.mrb[0].mxu0
      %635 = vmatprep.mubr.bf16.mxu0 0
      %636 = vmatmul.mubr.bf16.gmra.mrb[0].mxu0 %v593
      %v637 = vpop.f32.mrb[0].mxu0
      %v638 = vadd.f32 0.0, %v637
      %v639 = vpop.f32.mrb[0].mxu0
      %v640 = vpop.f32.mrb[0].mxu0
      %v641 = vadd.f32 0.0, %v640
      %v642 = vpop.f32.mrb[0].mxu0
      %643 = vdwg.mxu0
      %v644 = vmul.f32 %v630, %v493
      %v645 = vmul.f32 %v633, %v493
      %v646 = vmul.f32 %v638, %v493
      %v647 = vmul.f32 %v641, %v493
      %v648 = vadd.f32 %v644, %v507
      %v649 = vadd.f32 %v645, %v507
      %v650 = vadd.f32 %v646, %v507
      %v651 = vadd.f32 %v647, %v507
      %v652 = vxor.u32 %v648, 2147483648
      %v653 = vxor.u32 %v649, 2147483648
      %v654 = vxor.u32 %v650, 2147483648
      %v655 = vxor.u32 %v651, 2147483648
      %v656 = vmul.f32 %v652, 1.442695
      %v657 = vpow.pop %v656
      %v658 = vmul.f32 %v653, 1.442695
      %v659 = vpow.pop %v658
      %v660 = vmul.f32 %v654, 1.442695
      %v661 = vpow.pop %v660
      %v662 = vmul.f32 %v655, 1.442695
      %v663 = vpow.pop %v662
      %v664 = vadd.f32 %v657, 1.0
      %v665 = vadd.f32 %v659, 1.0
      %v666 = vadd.f32 %v661, 1.0
      %v667 = vadd.f32 %v663, 1.0
      %v668 = vrcp.pop %v664
      %v669 = vmul.f32 1.0, %v668
      %v670 = vrcp.pop %v665
      %v671 = vmul.f32 1.0, %v670
      %v672 = vrcp.pop %v666
      %v673 = vmul.f32 1.0, %v672
      %v674 = vrcp.pop %v667
      %v675 = vmul.f32 1.0, %v674
      %v676 = vmul.f32 %v648, %v669
      %v677 = vmul.f32 %v649, %v671
      %v678 = vmul.f32 %v650, %v673
      %v679 = vmul.f32 %v651, %v675
      %p680 = scmp.gt.s32.totalorder %s24, 0
      %s681 = scalar_select %p680, 1.0, 0.0
      %p682 = scmp.lt.s32.totalorder %s24, 3
      %s683 = scalar_select %p682, 1.0, 0.0
      %v684 = vstv %s681
      %v685 = vmul.f32 %v676, %v684
      %v686 = vmul.f32 %v677, %v684
      %v687 = vpack.c.bf16 %v686, %v685
      %688 = vst.msk [vmem:[#allocation2] sm:$0xff] %vm578, %v687
      %v689 = vstv %s683
      %v690 = vmul.f32 %v678, %v689
      %v691 = vmul.f32 %v679, %v689
      %v692 = vpack.c.bf16 %v691, %v690
      %s693 = scalar_lea.vmem [#allocation2], 40
      %694 = vst.msk [vmem:[%s693] sm:$0xff] %vm578, %v692
      %v695 = vlaneseq
      %v696 = vshrl.u32 %v695, 7
      %v697 = vadd.s32 %v696, 8
      %v698 = vadd.s32 %v696, 16
      %v699 = vadd.s32 %v696, 24
      %v700 = vadd.s32 %v696, 32
      %v701 = vadd.s32 %v696, 40
      %v702 = vadd.s32 %v696, 48
      %v703 = vadd.s32 %v696, 56
      %vm704 = vcmp.lt.s32.totalorder %v696, 0
      %v705 = vsub.s32 0, %v696
      %v706 = vsel %vm704, %v705, %v696
      %v707 = vshrl.u32 %v706, 4
      %v708 = vand.u32 %v706, 15
      %v709 = vsub.s32 0, %v708
      %v710 = vsel %vm704, %v709, %v708
      %vm711 = vcmp.lt.s32.totalorder %v697, 0
      %v712 = vsub.s32 0, %v697
      %v713 = vsel %vm711, %v712, %v697
      %v714 = vshrl.u32 %v713, 4
      %v715 = vand.u32 %v713, 15
      %v716 = vsub.s32 0, %v715
      %v717 = vsel %vm711, %v716, %v715
      %vm718 = vcmp.lt.s32.totalorder %v698, 0
      %v719 = vsub.s32 0, %v698
      %v720 = vsel %vm718, %v719, %v698
      %v721 = vshrl.u32 %v720, 4
      %v722 = vand.u32 %v720, 15
      %v723 = vsub.s32 0, %v722
      %v724 = vsel %vm718, %v723, %v722
      %vm725 = vcmp.lt.s32.totalorder %v699, 0
      %v726 = vsub.s32 0, %v699
      %v727 = vsel %vm725, %v726, %v699
      %v728 = vshrl.u32 %v727, 4
      %v729 = vand.u32 %v727, 15
      %v730 = vsub.s32 0, %v729
      %v731 = vsel %vm725, %v730, %v729
      %vm732 = vcmp.lt.s32.totalorder %v700, 0
      %v733 = vsub.s32 0, %v700
      %v734 = vsel %vm732, %v733, %v700
      %v735 = vshrl.u32 %v734, 4
      %v736 = vand.u32 %v734, 15
      %v737 = vsub.s32 0, %v736
      %v738 = vsel %vm732, %v737, %v736
      %vm739 = vcmp.lt.s32.totalorder %v701, 0
      %v740 = vsub.s32 0, %v701
      %v741 = vsel %vm739, %v740, %v701
      %v742 = vshrl.u32 %v741, 4
      %v743 = vand.u32 %v741, 15
      %v744 = vsub.s32 0, %v743
      %v745 = vsel %vm739, %v744, %v743
      %vm746 = vcmp.lt.s32.totalorder %v702, 0
      %v747 = vsub.s32 0, %v702
      %v748 = vsel %vm746, %v747, %v702
      %v749 = vshrl.u32 %v748, 4
      %v750 = vand.u32 %v748, 15
      %v751 = vsub.s32 0, %v750
      %v752 = vsel %vm746, %v751, %v750
      %vm753 = vcmp.lt.s32.totalorder %v703, 0
      %v754 = vsub.s32 0, %v703
      %v755 = vsel %vm753, %v754, %v703
      %v756 = vshrl.u32 %v755, 4
      %v757 = vand.u32 %v755, 15
      %v758 = vsub.s32 0, %v757
      %v759 = vsel %vm753, %v758, %v757
      %vm760 = vcmp.ne.s32.totalorder %v710, 0
      %vm761 = vcmp.ne.s32.totalorder %v717, 0
      %vm762 = vcmp.ne.s32.totalorder %v724, 0
      %vm763 = vcmp.ne.s32.totalorder %v731, 0
      %vm764 = vcmp.ne.s32.totalorder %v738, 0
      %vm765 = vcmp.ne.s32.totalorder %v745, 0
      %vm766 = vcmp.ne.s32.totalorder %v752, 0
      %vm767 = vcmp.ne.s32.totalorder %v759, 0
      %vm768 = vcmp.lt.s32.totalorder %v710, 0
      %vm769 = vcmp.lt.s32.totalorder %v717, 0
      %vm770 = vcmp.lt.s32.totalorder %v724, 0
      %vm771 = vcmp.lt.s32.totalorder %v731, 0
      %vm772 = vcmp.lt.s32.totalorder %v738, 0
      %vm773 = vcmp.lt.s32.totalorder %v745, 0
      %vm774 = vcmp.lt.s32.totalorder %v752, 0
      %vm775 = vcmp.lt.s32.totalorder %v759, 0
      %vm776 = vmand %vm768, %vm760
      %vm777 = vmand %vm769, %vm761
      %vm778 = vmand %vm770, %vm762
      %vm779 = vmand %vm771, %vm763
      %vm780 = vmand %vm772, %vm764
      %vm781 = vmand %vm773, %vm765
      %vm782 = vmand %vm774, %vm766
      %vm783 = vmand %vm775, %vm767
      %v784 = vadd.s32 %v710, 16
      %v785 = vadd.s32 %v717, 16
      %v786 = vadd.s32 %v724, 16
      %v787 = vadd.s32 %v731, 16
      %v788 = vadd.s32 %v738, 16
      %v789 = vadd.s32 %v745, 16
      %v790 = vadd.s32 %v752, 16
      %v791 = vadd.s32 %v759, 16
      %v792 = vsel %vm776, %v784, %v710
      %v793 = vsel %vm777, %v785, %v717
      %v794 = vsel %vm778, %v786, %v724
      %v795 = vsel %vm779, %v787, %v731
      %v796 = vsel %vm780, %v788, %v738
      %v797 = vsel %vm781, %v789, %v745
      %v798 = vsel %vm782, %v790, %v752
      %v799 = vsel %vm783, %v791, %v759
      %v800 = vld [vmem:[#allocation2] sm:$0xff]
      %v801 = vld [vmem:[#allocation2 + $0x8] sm:$0xff]
      %v802 = vld [vmem:[#allocation2 + $0x10] sm:$0xff]
      %v803 = vld [vmem:[#allocation2 + $0x18] sm:$0xff]
      %v804 = vld [vmem:[%s5] sm:$0x1]
      %v805 = vld [vmem:[%s577] sm:$0xff]
      %v806 = vld [vmem:[%s577 + $0x8] sm:$0xff]
      %v807 = vld [vmem:[%s577 + $0x10] sm:$0xff]
      %v808 = vld [vmem:[%s577 + $0x18] sm:$0xff]
      %s809 = scalar_lea.vmem %s5, 3
      %v810 = vld [vmem:[%s809] sm:$0x1]
      %v812 = vsel %vm578, %v805, 0
      %v815 = vsel %vm578, %v806, 0
      %v818 = vsel %vm578, %v807, 0
      %v821 = vsel %vm578, %v808, 0
      %vm823 = vcmask 1040384
      %v825 = vsel %vm823, %v810, 0
      %827 = vmatprep.subr.bf16.mxu0 0
      %828 = vmatpush1.bf16.msra.mxu0 %v825
      %829 = vmatprep.subr.bf16.mxu0 0
      %830 = vmatpush1.bf16.msra.mxu0 0
      %831 = vmatprep.subr.bf16.mxu0 0
      %832 = vmatpush1.bf16.msra.mxu0 0
      %833 = vmatprep.subr.bf16.mxu0 0
      %834 = vmatpush1.bf16.msra.mxu0 0
      %835 = vmatprep.subr.bf16.mxu0 0
      %836 = vmatpush1.bf16.msra.mxu0 0
      %837 = vmatprep.subr.bf16.mxu0 0
      %838 = vmatpush1.bf16.msra.mxu0 0
      %839 = vmatprep.subr.bf16.mxu0 0
      %840 = vmatpush1.bf16.msra.mxu0 0
      %841 = vmatprep.subr.bf16.mxu0 0
      %842 = vmatpush1.bf16.msra.mxu0 0
      %843 = vmatprep.subr.bf16.mxu0 0
      %844 = vmatpush1.bf16.msra.mxu0 0
      %845 = vmatprep.subr.bf16.mxu0 0
      %846 = vmatpush1.bf16.msra.mxu0 0
      %847 = vmatprep.subr.bf16.mxu0 0
      %848 = vmatpush1.bf16.msra.mxu0 0
      %849 = vmatprep.subr.bf16.mxu0 0
      %850 = vmatpush1.bf16.msra.mxu0 0
      %851 = vmatprep.subr.bf16.mxu0 0
      %852 = vmatpush1.bf16.msra.mxu0 0
      %853 = vmatprep.subr.bf16.mxu0 0
      %854 = vmatpush1.bf16.msra.mxu0 0
      %855 = vmatprep.subr.bf16.mxu0 0
      %856 = vmatpush1.bf16.msra.mxu0 0
      %857 = vmatprep.subr.bf16.mxu0 0
      %858 = vmatpush1.bf16.msra.mxu0 0
      %859 = vmatprep.mubr.bf16.mxu0 0
      %860 = vmatmul.mubr.bf16.gmra.mrb[0].mxu0 %v812
      %v861 = vpop.f32.mrb[0].mxu0
      %v862 = vadd.f32 0.0, %v861
      %v863 = vpop.f32.mrb[0].mxu0
      %v864 = vpop.f32.mrb[0].mxu0
      %v865 = vadd.f32 0.0, %v864
      %v866 = vpop.f32.mrb[0].mxu0
      %867 = vmatprep.mubr.bf16.mxu0 0
      %868 = vmatmul.mubr.bf16.gmra.mrb[0].mxu0 %v815
      %v869 = vpop.f32.mrb[0].mxu0
      %v870 = vadd.f32 0.0, %v869
      %v871 = vpop.f32.mrb[0].mxu0
      %v872 = vpop.f32.mrb[0].mxu0
      %v873 = vadd.f32 0.0, %v872
      %v874 = vpop.f32.mrb[0].mxu0
      %875 = vmatprep.mubr.bf16.mxu0 0
      %876 = vmatmul.mubr.bf16.gmra.mrb[0].mxu0 %v818
      %v877 = vpop.f32.mrb[0].mxu0
      %v878 = vadd.f32 0.0, %v877
      %v879 = vpop.f32.mrb[0].mxu0
      %v880 = vpop.f32.mrb[0].mxu0
      %v881 = vadd.f32 0.0, %v880
      %v882 = vpop.f32.mrb[0].mxu0
      %883 = vmatprep.mubr.bf16.mxu0 0
      %884 = vmatmul.mubr.bf16.gmra.mrb[0].mxu0 %v821
      %v885 = vpop.f32.mrb[0].mxu0
      %v886 = vadd.f32 0.0, %v885
      %v887 = vpop.f32.mrb[0].mxu0
      %v888 = vpop.f32.mrb[0].mxu0
      %v889 = vadd.f32 0.0, %v888
      %v890 = vpop.f32.mrb[0].mxu0
      %891 = vdwg.mxu0
      %v893 = vsel %vm578, %v800, 0
      %v896 = vsel %vm578, %v801, 0
      %v899 = vsel %vm578, %v802, 0
      %v902 = vsel %vm578, %v803, 0
      %v905 = vsel %vm823, %v804, 0
      %907 = vmatprep.subr.bf16.mxu0 0
      %908 = vmatpush1.bf16.msra.mxu0 %v905
      %909 = vmatprep.subr.bf16.mxu0 0
      %910 = vmatpush1.bf16.msra.mxu0 0
      %911 = vmatprep.subr.bf16.mxu0 0
      %912 = vmatpush1.bf16.msra.mxu0 0
      %913 = vmatprep.subr.bf16.mxu0 0
      %914 = vmatpush1.bf16.msra.mxu0 0
      %915 = vmatprep.subr.bf16.mxu0 0
      %916 = vmatpush1.bf16.msra.mxu0 0
      %917 = vmatprep.subr.bf16.mxu0 0
      %918 = vmatpush1.bf16.msra.mxu0 0
      %919 = vmatprep.subr.bf16.mxu0 0
      %920 = vmatpush1.bf16.msra.mxu0 0
      %921 = vmatprep.subr.bf16.mxu0 0
      %922 = vmatpush1.bf16.msra.mxu0 0
      %923 = vmatprep.subr.bf16.mxu0 0
      %924 = vmatpush1.bf16.msra.mxu0 0
      %925 = vmatprep.subr.bf16.mxu0 0
      %926 = vmatpush1.bf16.msra.mxu0 0
      %927 = vmatprep.subr.bf16.mxu0 0
      %928 = vmatpush1.bf16.msra.mxu0 0
      %929 = vmatprep.subr.bf16.mxu0 0
      %930 = vmatpush1.bf16.msra.mxu0 0
      %931 = vmatprep.subr.bf16.mxu0 0
      %932 = vmatpush1.bf16.msra.mxu0 0
      %933 = vmatprep.subr.bf16.mxu0 0
      %934 = vmatpush1.bf16.msra.mxu0 0
      %935 = vmatprep.subr.bf16.mxu0 0
      %936 = vmatpush1.bf16.msra.mxu0 0
      %937 = vmatprep.subr.bf16.mxu0 0
      %938 = vmatpush1.bf16.msra.mxu0 0
      %939 = vmatprep.mubr.bf16.mxu0 0
      %940 = vmatmul.mubr.bf16.gmra.mrb[0].mxu0 %v893
      %v941 = vpop.f32.mrb[0].mxu0
      %v942 = vadd.f32 %v862, %v941
      %v943 = vpop.f32.mrb[0].mxu0
      %v944 = vpop.f32.mrb[0].mxu0
      %v945 = vadd.f32 %v865, %v944
      %v946 = vpop.f32.mrb[0].mxu0
      %947 = vmatprep.mubr.bf16.mxu0 0
      %948 = vmatmul.mubr.bf16.gmra.mrb[0].mxu0 %v896
      %v949 = vpop.f32.mrb[0].mxu0
      %v950 = vadd.f32 %v870, %v949
      %v951 = vpop.f32.mrb[0].mxu0
      %v952 = vpop.f32.mrb[0].mxu0
      %v953 = vadd.f32 %v873, %v952
      %v954 = vpop.f32.mrb[0].mxu0
      %955 = vmatprep.mubr.bf16.mxu0 0
      %956 = vmatmul.mubr.bf16.gmra.mrb[0].mxu0 %v899
      %v957 = vpop.f32.mrb[0].mxu0
      %v958 = vadd.f32 %v878, %v957
      %v959 = vpop.f32.mrb[0].mxu0
      %v960 = vpop.f32.mrb[0].mxu0
      %v961 = vadd.f32 %v881, %v960
      %v962 = vpop.f32.mrb[0].mxu0
      %963 = vmatprep.mubr.bf16.mxu0 0
      %964 = vmatmul.mubr.bf16.gmra.mrb[0].mxu0 %v902
      %v965 = vpop.f32.mrb[0].mxu0
      %v966 = vadd.f32 %v886, %v965
      %v967 = vpop.f32.mrb[0].mxu0
      %v968 = vpop.f32.mrb[0].mxu0
      %v969 = vadd.f32 %v889, %v968
      %v970 = vpop.f32.mrb[0].mxu0
      %971 = vdwg.mxu0
      %s972 = scalar_lea.vmem [#allocation2], 16
      %v973 = vld [vmem:[%s972] sm:$0xff]
      %v974 = vld [vmem:[%s972 + $0x8] sm:$0xff]
      %v975 = vld [vmem:[%s972 + $0x10] sm:$0xff]
      %v976 = vld [vmem:[%s972 + $0x18] sm:$0xff]
      %s977 = scalar_lea.vmem %s5, 6
      %v978 = vld [vmem:[%s977] sm:$0x1]
      %v980 = vsel %vm578, %v973, 0
      %v983 = vsel %vm578, %v974, 0
      %v986 = vsel %vm578, %v975, 0
      %v989 = vsel %vm578, %v976, 0
      %v992 = vsel %vm823, %v978, 0
      %994 = vmatprep.subr.bf16.mxu0 0
      %995 = vmatpush1.bf16.msra.mxu0 %v992
      %996 = vmatprep.subr.bf16.mxu0 0
      %997 = vmatpush1.bf16.msra.mxu0 0
      %998 = vmatprep.subr.bf16.mxu0 0
      %999 = vmatpush1.bf16.msra.mxu0 0
      %1000 = vmatprep.subr.bf16.mxu0 0
      %1001 = vmatpush1.bf16.msra.mxu0 0
      %1002 = vmatprep.subr.bf16.mxu0 0
      %1003 = vmatpush1.bf16.msra.mxu0 0
      %1004 = vmatprep.subr.bf16.mxu0 0
      %1005 = vmatpush1.bf16.msra.mxu0 0
      %1006 = vmatprep.subr.bf16.mxu0 0
      %1007 = vmatpush1.bf16.msra.mxu0 0
      %1008 = vmatprep.subr.bf16.mxu0 0
      %1009 = vmatpush1.bf16.msra.mxu0 0
      %1010 = vmatprep.subr.bf16.mxu0 0
      %1011 = vmatpush1.bf16.msra.mxu0 0
      %1012 = vmatprep.subr.bf16.mxu0 0
      %1013 = vmatpush1.bf16.msra.mxu0 0
      %1014 = vmatprep.subr.bf16.mxu0 0
      %1015 = vmatpush1.bf16.msra.mxu0 0
      %1016 = vmatprep.subr.bf16.mxu0 0
      %1017 = vmatpush1.bf16.msra.mxu0 0
      %1018 = vmatprep.subr.bf16.mxu0 0
      %1019 = vmatpush1.bf16.msra.mxu0 0
      %1020 = vmatprep.subr.bf16.mxu0 0
      %1021 = vmatpush1.bf16.msra.mxu0 0
      %1022 = vmatprep.subr.bf16.mxu0 0
      %1023 = vmatpush1.bf16.msra.mxu0 0
      %1024 = vmatprep.subr.bf16.mxu0 0
      %1025 = vmatpush1.bf16.msra.mxu0 0
      %1026 = vmatprep.mubr.bf16.mxu0 0
      %1027 = vmatmul.mubr.bf16.gmra.mrb[0].mxu0 %v980
      %v1028 = vpop.f32.mrb[0].mxu0
      %v1029 = vadd.f32 0.0, %v1028
      %v1030 = vpop.f32.mrb[0].mxu0
      %v1031 = vpop.f32.mrb[0].mxu0
      %v1032 = vadd.f32 0.0, %v1031
      %v1033 = vpop.f32.mrb[0].mxu0
      %1034 = vmatprep.mubr.bf16.mxu0 0
      %1035 = vmatmul.mubr.bf16.gmra.mrb[0].mxu0 %v983
      %v1036 = vpop.f32.mrb[0].mxu0
      %v1037 = vadd.f32 0.0, %v1036
      %v1038 = vpop.f32.mrb[0].mxu0
      %v1039 = vpop.f32.mrb[0].mxu0
      %v1040 = vadd.f32 0.0, %v1039
      %v1041 = vpop.f32.mrb[0].mxu0
      %1042 = vmatprep.mubr.bf16.mxu0 0
      %1043 = vmatmul.mubr.bf16.gmra.mrb[0].mxu0 %v986
      %v1044 = vpop.f32.mrb[0].mxu0
      %v1045 = vadd.f32 0.0, %v1044
      %v1046 = vpop.f32.mrb[0].mxu0
      %v1047 = vpop.f32.mrb[0].mxu0
      %v1048 = vadd.f32 0.0, %v1047
      %v1049 = vpop.f32.mrb[0].mxu0
      %1050 = vmatprep.mubr.bf16.mxu0 0
      %1051 = vmatmul.mubr.bf16.gmra.mrb[0].mxu0 %v989
      %v1052 = vpop.f32.mrb[0].mxu0
      %v1053 = vadd.f32 0.0, %v1052
      %v1054 = vpop.f32.mrb[0].mxu0
      %v1055 = vpop.f32.mrb[0].mxu0
      %v1056 = vadd.f32 0.0, %v1055
      %v1057 = vpop.f32.mrb[0].mxu0
      %1058 = vdwg.mxu0
      %v1059 = vadd.f32 %v942, %v1029
      %v1060 = vadd.f32 %v945, %v1032
      %v1061 = vadd.f32 %v950, %v1037
      %v1062 = vadd.f32 %v953, %v1040
      %v1063 = vadd.f32 %v958, %v1045
      %v1064 = vadd.f32 %v961, %v1048
      %v1065 = vadd.f32 %v966, %v1053
      %v1066 = vadd.f32 %v969, %v1056
      %v1067 = vrot.slane %v1059, 7
      %v1068 = vrot.slane %v1060, 7
      %v1069 = vrot.slane %v1061, 7
      %v1070 = vrot.slane %v1062, 7
      %v1071 = vrot.slane %v1063, 7
      %v1072 = vrot.slane %v1064, 7
      %v1073 = vrot.slane %v1065, 7
      %v1074 = vrot.slane %v1066, 7
      %vm1075 = vcmp.lt.s32.totalorder %v696, 1
      %v1076 = vsel %vm1075, %v1073, %v1074
      %v1077 = vsel %vm1075, %v1072, %v1073
      %v1078 = vsel %vm1075, %v1071, %v1072
      %v1079 = vsel %vm1075, %v1070, %v1071
      %v1080 = vsel %vm1075, %v1069, %v1070
      %v1081 = vsel %vm1075, %v1068, %v1069
      %v1082 = vsel %vm1075, %v1067, %v1068
      %v1083 = vsel %vm1075, %v1074, %v1067
      %vm1084 = vcmp.eq.s32.totalorder %v792, 0
      %vm1085 = vcmp.eq.s32.totalorder %v793, 0
      %vm1086 = vcmp.eq.s32.totalorder %v794, 0
      %vm1087 = vcmp.eq.s32.totalorder %v795, 0
      %vm1088 = vcmp.eq.s32.totalorder %v796, 0
      %vm1089 = vcmp.eq.s32.totalorder %v797, 0
      %vm1090 = vcmp.eq.s32.totalorder %v798, 0
      %vm1091 = vcmp.eq.s32.totalorder %v799, 0
      %v1092 = vsel %vm1084, 0.0, %v1083
      %v1093 = vsel %vm1085, 0.0, %v1082
      %v1094 = vsel %vm1086, 0.0, %v1081
      %v1095 = vsel %vm1087, 0.0, %v1080
      %v1096 = vsel %vm1088, 0.0, %v1079
      %v1097 = vsel %vm1089, 0.0, %v1078
      %v1098 = vsel %vm1090, 0.0, %v1077
      %v1099 = vsel %vm1091, 0.0, %v1076
      %s1100 = scalar_lea.vmem %s5, 1
      %v1101 = vld [vmem:[%s1100] sm:$0x1]
      %s1102 = scalar_lea.vmem %s5, 4
      %v1103 = vld [vmem:[%s1102] sm:$0x1]
      %v1105 = vsel %vm823, %v1103, 0
      %1107 = vmatprep.subr.bf16.mxu0 0
      %1108 = vmatpush1.bf16.msra.mxu0 %v1105
      %1109 = vmatprep.subr.bf16.mxu0 0
      %1110 = vmatpush1.bf16.msra.mxu0 0
      %1111 = vmatprep.subr.bf16.mxu0 0
      %1112 = vmatpush1.bf16.msra.mxu0 0
      %1113 = vmatprep.subr.bf16.mxu0 0
      %1114 = vmatpush1.bf16.msra.mxu0 0
      %1115 = vmatprep.subr.bf16.mxu0 0
      %1116 = vmatpush1.bf16.msra.mxu0 0
      %1117 = vmatprep.subr.bf16.mxu0 0
      %1118 = vmatpush1.bf16.msra.mxu0 0
      %1119 = vmatprep.subr.bf16.mxu0 0
      %1120 = vmatpush1.bf16.msra.mxu0 0
      %1121 = vmatprep.subr.bf16.mxu0 0
      %1122 = vmatpush1.bf16.msra.mxu0 0
      %1123 = vmatprep.subr.bf16.mxu0 0
      %1124 = vmatpush1.bf16.msra.mxu0 0
      %1125 = vmatprep.subr.bf16.mxu0 0
      %1126 = vmatpush1.bf16.msra.mxu0 0
      %1127 = vmatprep.subr.bf16.mxu0 0
      %1128 = vmatpush1.bf16.msra.mxu0 0
      %1129 = vmatprep.subr.bf16.mxu0 0
      %1130 = vmatpush1.bf16.msra.mxu0 0
      %1131 = vmatprep.subr.bf16.mxu0 0
      %1132 = vmatpush1.bf16.msra.mxu0 0
      %1133 = vmatprep.subr.bf16.mxu0 0
      %1134 = vmatpush1.bf16.msra.mxu0 0
      %1135 = vmatprep.subr.bf16.mxu0 0
      %1136 = vmatpush1.bf16.msra.mxu0 0
      %1137 = vmatprep.subr.bf16.mxu0 0
      %1138 = vmatpush1.bf16.msra.mxu0 0
      %1139 = vmatprep.mubr.bf16.mxu0 0
      %1140 = vmatmul.mubr.bf16.gmra.mrb[0].mxu0 %v812
      %v1141 = vpop.f32.mrb[0].mxu0
      %v1142 = vadd.f32 0.0, %v1141
      %v1143 = vpop.f32.mrb[0].mxu0
      %v1144 = vpop.f32.mrb[0].mxu0
      %v1145 = vadd.f32 0.0, %v1144
      %v1146 = vpop.f32.mrb[0].mxu0
      %1147 = vmatprep.mubr.bf16.mxu0 0
      %1148 = vmatmul.mubr.bf16.gmra.mrb[0].mxu0 %v815
      %v1149 = vpop.f32.mrb[0].mxu0
      %v1150 = vadd.f32 0.0, %v1149
      %v1151 = vpop.f32.mrb[0].mxu0
      %v1152 = vpop.f32.mrb[0].mxu0
      %v1153 = vadd.f32 0.0, %v1152
      %v1154 = vpop.f32.mrb[0].mxu0
      %1155 = vmatprep.mubr.bf16.mxu0 0
      %1156 = vmatmul.mubr.bf16.gmra.mrb[0].mxu0 %v818
      %v1157 = vpop.f32.mrb[0].mxu0
      %v1158 = vadd.f32 0.0, %v1157
      %v1159 = vpop.f32.mrb[0].mxu0
      %v1160 = vpop.f32.mrb[0].mxu0
      %v1161 = vadd.f32 0.0, %v1160
      %v1162 = vpop.f32.mrb[0].mxu0
      %1163 = vmatprep.mubr.bf16.mxu0 0
      %1164 = vmatmul.mubr.bf16.gmra.mrb[0].mxu0 %v821
      %v1165 = vpop.f32.mrb[0].mxu0
      %v1166 = vadd.f32 0.0, %v1165
      %v1167 = vpop.f32.mrb[0].mxu0
      %v1168 = vpop.f32.mrb[0].mxu0
      %v1169 = vadd.f32 0.0, %v1168
      %v1170 = vpop.f32.mrb[0].mxu0
      %1171 = vdwg.mxu0
      %v1173 = vsel %vm823, %v1101, 0
      %1175 = vmatprep.subr.bf16.mxu0 0
      %1176 = vmatpush1.bf16.msra.mxu0 %v1173
      %1177 = vmatprep.subr.bf16.mxu0 0
      %1178 = vmatpush1.bf16.msra.mxu0 0
      %1179 = vmatprep.subr.bf16.mxu0 0
      %1180 = vmatpush1.bf16.msra.mxu0 0
      %1181 = vmatprep.subr.bf16.mxu0 0
      %1182 = vmatpush1.bf16.msra.mxu0 0
      %1183 = vmatprep.subr.bf16.mxu0 0
      %1184 = vmatpush1.bf16.msra.mxu0 0
      %1185 = vmatprep.subr.bf16.mxu0 0
      %1186 = vmatpush1.bf16.msra.mxu0 0
      %1187 = vmatprep.subr.bf16.mxu0 0
      %1188 = vmatpush1.bf16.msra.mxu0 0
      %1189 = vmatprep.subr.bf16.mxu0 0
      %1190 = vmatpush1.bf16.msra.mxu0 0
      %1191 = vmatprep.subr.bf16.mxu0 0
      %1192 = vmatpush1.bf16.msra.mxu0 0
      %1193 = vmatprep.subr.bf16.mxu0 0
      %1194 = vmatpush1.bf16.msra.mxu0 0
      %1195 = vmatprep.subr.bf16.mxu0 0
      %1196 = vmatpush1.bf16.msra.mxu0 0
      %1197 = vmatprep.subr.bf16.mxu0 0
      %1198 = vmatpush1.bf16.msra.mxu0 0
      %1199 = vmatprep.subr.bf16.mxu0 0
      %1200 = vmatpush1.bf16.msra.mxu0 0
      %1201 = vmatprep.subr.bf16.mxu0 0
      %1202 = vmatpush1.bf16.msra.mxu0 0
      %1203 = vmatprep.subr.bf16.mxu0 0
      %1204 = vmatpush1.bf16.msra.mxu0 0
      %1205 = vmatprep.subr.bf16.mxu0 0
      %1206 = vmatpush1.bf16.msra.mxu0 0
      %1207 = vmatprep.mubr.bf16.mxu0 0
      %1208 = vmatmul.mubr.bf16.gmra.mrb[0].mxu0 %v893
      %v1209 = vpop.f32.mrb[0].mxu0
      %v1210 = vadd.f32 %v1142, %v1209
      %v1211 = vpop.f32.mrb[0].mxu0
      %v1212 = vpop.f32.mrb[0].mxu0
      %v1213 = vadd.f32 %v1145, %v1212
      %v1214 = vpop.f32.mrb[0].mxu0
      %1215 = vmatprep.mubr.bf16.mxu0 0
      %1216 = vmatmul.mubr.bf16.gmra.mrb[0].mxu0 %v896
      %v1217 = vpop.f32.mrb[0].mxu0
      %v1218 = vadd.f32 %v1150, %v1217
      %v1219 = vpop.f32.mrb[0].mxu0
      %v1220 = vpop.f32.mrb[0].mxu0
      %v1221 = vadd.f32 %v1153, %v1220
      %v1222 = vpop.f32.mrb[0].mxu0
      %1223 = vmatprep.mubr.bf16.mxu0 0
      %1224 = vmatmul.mubr.bf16.gmra.mrb[0].mxu0 %v899
      %v1225 = vpop.f32.mrb[0].mxu0
      %v1226 = vadd.f32 %v1158, %v1225
      %v1227 = vpop.f32.mrb[0].mxu0
      %v1228 = vpop.f32.mrb[0].mxu0
      %v1229 = vadd.f32 %v1161, %v1228
      %v1230 = vpop.f32.mrb[0].mxu0
      %1231 = vmatprep.mubr.bf16.mxu0 0
      %1232 = vmatmul.mubr.bf16.gmra.mrb[0].mxu0 %v902
      %v1233 = vpop.f32.mrb[0].mxu0
      %v1234 = vadd.f32 %v1166, %v1233
      %v1235 = vpop.f32.mrb[0].mxu0
      %v1236 = vpop.f32.mrb[0].mxu0
      %v1237 = vadd.f32 %v1169, %v1236
      %v1238 = vpop.f32.mrb[0].mxu0
      %1239 = vdwg.mxu0
      %s1240 = scalar_lea.vmem %s5, 7
      %v1241 = vld [vmem:[%s1240] sm:$0x1]
      %v1243 = vsel %vm823, %v1241, 0
      %1245 = vmatprep.subr.bf16.mxu0 0
      %1246 = vmatpush1.bf16.msra.mxu0 %v1243
      %1247 = vmatprep.subr.bf16.mxu0 0
      %1248 = vmatpush1.bf16.msra.mxu0 0
      %1249 = vmatprep.subr.bf16.mxu0 0
      %1250 = vmatpush1.bf16.msra.mxu0 0
      %1251 = vmatprep.subr.bf16.mxu0 0
      %1252 = vmatpush1.bf16.msra.mxu0 0
      %1253 = vmatprep.subr.bf16.mxu0 0
      %1254 = vmatpush1.bf16.msra.mxu0 0
      %1255 = vmatprep.subr.bf16.mxu0 0
      %1256 = vmatpush1.bf16.msra.mxu0 0
      %1257 = vmatprep.subr.bf16.mxu0 0
      %1258 = vmatpush1.bf16.msra.mxu0 0
      %1259 = vmatprep.subr.bf16.mxu0 0
      %1260 = vmatpush1.bf16.msra.mxu0 0
      %1261 = vmatprep.subr.bf16.mxu0 0
      %1262 = vmatpush1.bf16.msra.mxu0 0
      %1263 = vmatprep.subr.bf16.mxu0 0
      %1264 = vmatpush1.bf16.msra.mxu0 0
      %1265 = vmatprep.subr.bf16.mxu0 0
      %1266 = vmatpush1.bf16.msra.mxu0 0
      %1267 = vmatprep.subr.bf16.mxu0 0
      %1268 = vmatpush1.bf16.msra.mxu0 0
      %1269 = vmatprep.subr.bf16.mxu0 0
      %1270 = vmatpush1.bf16.msra.mxu0 0
      %1271 = vmatprep.subr.bf16.mxu0 0
      %1272 = vmatpush1.bf16.msra.mxu0 0
      %1273 = vmatprep.subr.bf16.mxu0 0
      %1274 = vmatpush1.bf16.msra.mxu0 0
      %1275 = vmatprep.subr.bf16.mxu0 0
      %1276 = vmatpush1.bf16.msra.mxu0 0
      %1277 = vmatprep.mubr.bf16.mxu0 0
      %1278 = vmatmul.mubr.bf16.gmra.mrb[0].mxu0 %v980
      %v1279 = vpop.f32.mrb[0].mxu0
      %v1280 = vadd.f32 0.0, %v1279
      %v1281 = vpop.f32.mrb[0].mxu0
      %v1282 = vpop.f32.mrb[0].mxu0
      %v1283 = vadd.f32 0.0, %v1282
      %v1284 = vpop.f32.mrb[0].mxu0
      %1285 = vmatprep.mubr.bf16.mxu0 0
      %1286 = vmatmul.mubr.bf16.gmra.mrb[0].mxu0 %v983
      %v1287 = vpop.f32.mrb[0].mxu0
      %v1288 = vadd.f32 0.0, %v1287
      %v1289 = vpop.f32.mrb[0].mxu0
      %v1290 = vpop.f32.mrb[0].mxu0
      %v1291 = vadd.f32 0.0, %v1290
      %v1292 = vpop.f32.mrb[0].mxu0
      %1293 = vmatprep.mubr.bf16.mxu0 0
      %1294 = vmatmul.mubr.bf16.gmra.mrb[0].mxu0 %v986
      %v1295 = vpop.f32.mrb[0].mxu0
      %v1296 = vadd.f32 0.0, %v1295
      %v1297 = vpop.f32.mrb[0].mxu0
      %v1298 = vpop.f32.mrb[0].mxu0
      %v1299 = vadd.f32 0.0, %v1298
      %v1300 = vpop.f32.mrb[0].mxu0
      %1301 = vmatprep.mubr.bf16.mxu0 0
      %1302 = vmatmul.mubr.bf16.gmra.mrb[0].mxu0 %v989
      %v1303 = vpop.f32.mrb[0].mxu0
      %v1304 = vadd.f32 0.0, %v1303
      %v1305 = vpop.f32.mrb[0].mxu0
      %v1306 = vpop.f32.mrb[0].mxu0
      %v1307 = vadd.f32 0.0, %v1306
      %v1308 = vpop.f32.mrb[0].mxu0
      %1309 = vdwg.mxu0
      %v1310 = vadd.f32 %v1210, %v1280
      %v1311 = vadd.f32 %v1213, %v1283
      %v1312 = vadd.f32 %v1218, %v1288
      %v1313 = vadd.f32 %v1221, %v1291
      %v1314 = vadd.f32 %v1226, %v1296
      %v1315 = vadd.f32 %v1229, %v1299
      %v1316 = vadd.f32 %v1234, %v1304
      %v1317 = vadd.f32 %v1237, %v1307
      %v1318 = vadd.f32 %v1092, %v1310
      %v1319 = vadd.f32 %v1093, %v1311
      %v1320 = vadd.f32 %v1094, %v1312
      %v1321 = vadd.f32 %v1095, %v1313
      %v1322 = vadd.f32 %v1096, %v1314
      %v1323 = vadd.f32 %v1097, %v1315
      %v1324 = vadd.f32 %v1098, %v1316
      %v1325 = vadd.f32 %v1099, %v1317
      %s1326 = scalar_lea.vmem %s5, 2
      %v1327 = vld [vmem:[%s1326] sm:$0x1]
      %s1328 = scalar_lea.vmem %s5, 5
      %v1329 = vld [vmem:[%s1328] sm:$0x1]
      %v1331 = vsel %vm823, %v1329, 0
      %1333 = vmatprep.subr.bf16.mxu0 0
      %1334 = vmatpush1.bf16.msra.mxu0 %v1331
      %1335 = vmatprep.subr.bf16.mxu0 0
      %1336 = vmatpush1.bf16.msra.mxu0 0
      %1337 = vmatprep.subr.bf16.mxu0 0
      %1338 = vmatpush1.bf16.msra.mxu0 0
      %1339 = vmatprep.subr.bf16.mxu0 0
      %1340 = vmatpush1.bf16.msra.mxu0 0
      %1341 = vmatprep.subr.bf16.mxu0 0
      %1342 = vmatpush1.bf16.msra.mxu0 0
      %1343 = vmatprep.subr.bf16.mxu0 0
      %1344 = vmatpush1.bf16.msra.mxu0 0
      %1345 = vmatprep.subr.bf16.mxu0 0
      %1346 = vmatpush1.bf16.msra.mxu0 0
      %1347 = vmatprep.subr.bf16.mxu0 0
      %1348 = vmatpush1.bf16.msra.mxu0 0
      %1349 = vmatprep.subr.bf16.mxu0 0
      %1350 = vmatpush1.bf16.msra.mxu0 0
      %1351 = vmatprep.subr.bf16.mxu0 0
      %1352 = vmatpush1.bf16.msra.mxu0 0
      %1353 = vmatprep.subr.bf16.mxu0 0
      %1354 = vmatpush1.bf16.msra.mxu0 0
      %1355 = vmatprep.subr.bf16.mxu0 0
      %1356 = vmatpush1.bf16.msra.mxu0 0
      %1357 = vmatprep.subr.bf16.mxu0 0
      %1358 = vmatpush1.bf16.msra.mxu0 0
      %1359 = vmatprep.subr.bf16.mxu0 0
      %1360 = vmatpush1.bf16.msra.mxu0 0
      %1361 = vmatprep.subr.bf16.mxu0 0
      %1362 = vmatpush1.bf16.msra.mxu0 0
      %1363 = vmatprep.subr.bf16.mxu0 0
      %1364 = vmatpush1.bf16.msra.mxu0 0
      %1365 = vmatprep.mubr.bf16.mxu0 0
      %1366 = vmatmul.mubr.bf16.gmra.mrb[0].mxu0 %v812
      %v1367 = vpop.f32.mrb[0].mxu0
      %v1368 = vadd.f32 0.0, %v1367
      %v1369 = vpop.f32.mrb[0].mxu0
      %v1370 = vpop.f32.mrb[0].mxu0
      %v1371 = vadd.f32 0.0, %v1370
      %v1372 = vpop.f32.mrb[0].mxu0
      %1373 = vmatprep.mubr.bf16.mxu0 0
      %1374 = vmatmul.mubr.bf16.gmra.mrb[0].mxu0 %v815
      %v1375 = vpop.f32.mrb[0].mxu0
      %v1376 = vadd.f32 0.0, %v1375
      %v1377 = vpop.f32.mrb[0].mxu0
      %v1378 = vpop.f32.mrb[0].mxu0
      %v1379 = vadd.f32 0.0, %v1378
      %v1380 = vpop.f32.mrb[0].mxu0
      %1381 = vmatprep.mubr.bf16.mxu0 0
      %1382 = vmatmul.mubr.bf16.gmra.mrb[0].mxu0 %v818
      %v1383 = vpop.f32.mrb[0].mxu0
      %v1384 = vadd.f32 0.0, %v1383
      %v1385 = vpop.f32.mrb[0].mxu0
      %v1386 = vpop.f32.mrb[0].mxu0
      %v1387 = vadd.f32 0.0, %v1386
      %v1388 = vpop.f32.mrb[0].mxu0
      %1389 = vmatprep.mubr.bf16.mxu0 0
      %1390 = vmatmul.mubr.bf16.gmra.mrb[0].mxu0 %v821
      %v1391 = vpop.f32.mrb[0].mxu0
      %v1392 = vadd.f32 0.0, %v1391
      %v1393 = vpop.f32.mrb[0].mxu0
      %v1394 = vpop.f32.mrb[0].mxu0
      %v1395 = vadd.f32 0.0, %v1394
      %v1396 = vpop.f32.mrb[0].mxu0
      %1397 = vdwg.mxu0
      %v1399 = vsel %vm823, %v1327, 0
      %1401 = vmatprep.subr.bf16.mxu0 0
      %1402 = vmatpush1.bf16.msra.mxu0 %v1399
      %1403 = vmatprep.subr.bf16.mxu0 0
      %1404 = vmatpush1.bf16.msra.mxu0 0
      %1405 = vmatprep.subr.bf16.mxu0 0
      %1406 = vmatpush1.bf16.msra.mxu0 0
      %1407 = vmatprep.subr.bf16.mxu0 0
      %1408 = vmatpush1.bf16.msra.mxu0 0
      %1409 = vmatprep.subr.bf16.mxu0 0
      %1410 = vmatpush1.bf16.msra.mxu0 0
      %1411 = vmatprep.subr.bf16.mxu0 0
      %1412 = vmatpush1.bf16.msra.mxu0 0
      %1413 = vmatprep.subr.bf16.mxu0 0
      %1414 = vmatpush1.bf16.msra.mxu0 0
      %1415 = vmatprep.subr.bf16.mxu0 0
      %1416 = vmatpush1.bf16.msra.mxu0 0
      %1417 = vmatprep.subr.bf16.mxu0 0
      %1418 = vmatpush1.bf16.msra.mxu0 0
      %1419 = vmatprep.subr.bf16.mxu0 0
      %1420 = vmatpush1.bf16.msra.mxu0 0
      %1421 = vmatprep.subr.bf16.mxu0 0
      %1422 = vmatpush1.bf16.msra.mxu0 0
      %1423 = vmatprep.subr.bf16.mxu0 0
      %1424 = vmatpush1.bf16.msra.mxu0 0
      %1425 = vmatprep.subr.bf16.mxu0 0
      %1426 = vmatpush1.bf16.msra.mxu0 0
      %1427 = vmatprep.subr.bf16.mxu0 0
      %1428 = vmatpush1.bf16.msra.mxu0 0
      %1429 = vmatprep.subr.bf16.mxu0 0
      %1430 = vmatpush1.bf16.msra.mxu0 0
      %1431 = vmatprep.subr.bf16.mxu0 0
      %1432 = vmatpush1.bf16.msra.mxu0 0
      %1433 = vmatprep.mubr.bf16.mxu0 0
      %1434 = vmatmul.mubr.bf16.gmra.mrb[0].mxu0 %v893
      %v1435 = vpop.f32.mrb[0].mxu0
      %v1436 = vadd.f32 %v1368, %v1435
      %v1437 = vpop.f32.mrb[0].mxu0
      %v1438 = vpop.f32.mrb[0].mxu0
      %v1439 = vadd.f32 %v1371, %v1438
      %v1440 = vpop.f32.mrb[0].mxu0
      %1441 = vmatprep.mubr.bf16.mxu0 0
      %1442 = vmatmul.mubr.bf16.gmra.mrb[0].mxu0 %v896
      %v1443 = vpop.f32.mrb[0].mxu0
      %v1444 = vadd.f32 %v1376, %v1443
      %v1445 = vpop.f32.mrb[0].mxu0
      %v1446 = vpop.f32.mrb[0].mxu0
      %v1447 = vadd.f32 %v1379, %v1446
      %v1448 = vpop.f32.mrb[0].mxu0
      %1449 = vmatprep.mubr.bf16.mxu0 0
      %1450 = vmatmul.mubr.bf16.gmra.mrb[0].mxu0 %v899
      %v1451 = vpop.f32.mrb[0].mxu0
      %v1452 = vadd.f32 %v1384, %v1451
      %v1453 = vpop.f32.mrb[0].mxu0
      %v1454 = vpop.f32.mrb[0].mxu0
      %v1455 = vadd.f32 %v1387, %v1454
      %v1456 = vpop.f32.mrb[0].mxu0
      %1457 = vmatprep.mubr.bf16.mxu0 0
      %1458 = vmatmul.mubr.bf16.gmra.mrb[0].mxu0 %v902
      %v1459 = vpop.f32.mrb[0].mxu0
      %v1460 = vadd.f32 %v1392, %v1459
      %v1461 = vpop.f32.mrb[0].mxu0
      %v1462 = vpop.f32.mrb[0].mxu0
      %v1463 = vadd.f32 %v1395, %v1462
      %v1464 = vpop.f32.mrb[0].mxu0
      %1465 = vdwg.mxu0
      %s1466 = scalar_lea.vmem %s5, 8
      %v1467 = vld [vmem:[%s1466] sm:$0x1]
      %v1469 = vsel %vm823, %v1467, 0
      %1471 = vmatprep.subr.bf16.mxu0 0
      %1472 = vmatpush1.bf16.msra.mxu0 %v1469
      %1473 = vmatprep.subr.bf16.mxu0 0
      %1474 = vmatpush1.bf16.msra.mxu0 0
      %1475 = vmatprep.subr.bf16.mxu0 0
      %1476 = vmatpush1.bf16.msra.mxu0 0
      %1477 = vmatprep.subr.bf16.mxu0 0
      %1478 = vmatpush1.bf16.msra.mxu0 0
      %1479 = vmatprep.subr.bf16.mxu0 0
      %1480 = vmatpush1.bf16.msra.mxu0 0
      %1481 = vmatprep.subr.bf16.mxu0 0
      %1482 = vmatpush1.bf16.msra.mxu0 0
      %1483 = vmatprep.subr.bf16.mxu0 0
      %1484 = vmatpush1.bf16.msra.mxu0 0
      %1485 = vmatprep.subr.bf16.mxu0 0
      %1486 = vmatpush1.bf16.msra.mxu0 0
      %1487 = vmatprep.subr.bf16.mxu0 0
      %1488 = vmatpush1.bf16.msra.mxu0 0
      %1489 = vmatprep.subr.bf16.mxu0 0
      %1490 = vmatpush1.bf16.msra.mxu0 0
      %1491 = vmatprep.subr.bf16.mxu0 0
      %1492 = vmatpush1.bf16.msra.mxu0 0
      %1493 = vmatprep.subr.bf16.mxu0 0
      %1494 = vmatpush1.bf16.msra.mxu0 0
      %1495 = vmatprep.subr.bf16.mxu0 0
      %1496 = vmatpush1.bf16.msra.mxu0 0
      %1497 = vmatprep.subr.bf16.mxu0 0
      %1498 = vmatpush1.bf16.msra.mxu0 0
      %1499 = vmatprep.subr.bf16.mxu0 0
      %1500 = vmatpush1.bf16.msra.mxu0 0
      %1501 = vmatprep.subr.bf16.mxu0 0
      %1502 = vmatpush1.bf16.msra.mxu0 0
      %1503 = vmatprep.mubr.bf16.mxu0 0
      %1504 = vmatmul.mubr.bf16.gmra.mrb[0].mxu0 %v980
      %v1505 = vpop.f32.mrb[0].mxu0
      %v1506 = vadd.f32 0.0, %v1505
      %v1507 = vpop.f32.mrb[0].mxu0
      %v1508 = vpop.f32.mrb[0].mxu0
      %v1509 = vadd.f32 0.0, %v1508
      %v1510 = vpop.f32.mrb[0].mxu0
      %1511 = vmatprep.mubr.bf16.mxu0 0
      %1512 = vmatmul.mubr.bf16.gmra.mrb[0].mxu0 %v983
      %v1513 = vpop.f32.mrb[0].mxu0
      %v1514 = vadd.f32 0.0, %v1513
      %v1515 = vpop.f32.mrb[0].mxu0
      %v1516 = vpop.f32.mrb[0].mxu0
      %v1517 = vadd.f32 0.0, %v1516
      %v1518 = vpop.f32.mrb[0].mxu0
      %1519 = vmatprep.mubr.bf16.mxu0 0
      %1520 = vmatmul.mubr.bf16.gmra.mrb[0].mxu0 %v986
      %v1521 = vpop.f32.mrb[0].mxu0
      %v1522 = vadd.f32 0.0, %v1521
      %v1523 = vpop.f32.mrb[0].mxu0
      %v1524 = vpop.f32.mrb[0].mxu0
      %v1525 = vadd.f32 0.0, %v1524
      %v1526 = vpop.f32.mrb[0].mxu0
      %1527 = vmatprep.mubr.bf16.mxu0 0
      %1528 = vmatmul.mubr.bf16.gmra.mrb[0].mxu0 %v989
      %v1529 = vpop.f32.mrb[0].mxu0
      %v1530 = vadd.f32 0.0, %v1529
      %v1531 = vpop.f32.mrb[0].mxu0
      %v1532 = vpop.f32.mrb[0].mxu0
      %v1533 = vadd.f32 0.0, %v1532
      %v1534 = vpop.f32.mrb[0].mxu0
      %1535 = vdwg.mxu0
      %v1536 = vadd.f32 %v1436, %v1506
      %v1537 = vadd.f32 %v1439, %v1509
      %v1538 = vadd.f32 %v1444, %v1514
      %v1539 = vadd.f32 %v1447, %v1517
      %v1540 = vadd.f32 %v1452, %v1522
      %v1541 = vadd.f32 %v1455, %v1525
      %v1542 = vadd.f32 %v1460, %v1530
      %v1543 = vadd.f32 %v1463, %v1533
      %v1544 = vrot.slane %v1536, 1
      %v1545 = vrot.slane %v1537, 1
      %v1546 = vrot.slane %v1538, 1
      %v1547 = vrot.slane %v1539, 1
      %v1548 = vrot.slane %v1540, 1
      %v1549 = vrot.slane %v1541, 1
      %v1550 = vrot.slane %v1542, 1
      %v1551 = vrot.slane %v1543, 1
      %vm1552 = vcmp.lt.s32.totalorder %v696, 7
      %v1553 = vsel %vm1552, %v1550, %v1551
      %v1554 = vsel %vm1552, %v1549, %v1550
      %v1555 = vsel %vm1552, %v1548, %v1549
      %v1556 = vsel %vm1552, %v1547, %v1548
      %v1557 = vsel %vm1552, %v1546, %v1547
      %v1558 = vsel %vm1552, %v1545, %v1546
      %v1559 = vsel %vm1552, %v1544, %v1545
      %v1560 = vsel %vm1552, %v1551, %v1544
      %vm1561 = vcmp.eq.s32.totalorder %v792, 15
      %vm1562 = vcmp.eq.s32.totalorder %v793, 15
      %vm1563 = vcmp.eq.s32.totalorder %v794, 15
      %vm1564 = vcmp.eq.s32.totalorder %v795, 15
      %vm1565 = vcmp.eq.s32.totalorder %v796, 15
      %vm1566 = vcmp.eq.s32.totalorder %v797, 15
      %vm1567 = vcmp.eq.s32.totalorder %v798, 15
      %vm1568 = vcmp.eq.s32.totalorder %v799, 15
      %v1569 = vsel %vm1561, 0.0, %v1559
      %v1570 = vsel %vm1562, 0.0, %v1558
      %v1571 = vsel %vm1563, 0.0, %v1557
      %v1572 = vsel %vm1564, 0.0, %v1556
      %v1573 = vsel %vm1565, 0.0, %v1555
      %v1574 = vsel %vm1566, 0.0, %v1554
      %v1575 = vsel %vm1567, 0.0, %v1553
      %v1576 = vsel %vm1568, 0.0, %v1560
      %v1577 = vadd.f32 %v1318, %v1569
      %v1578 = vadd.f32 %v1319, %v1570
      %v1579 = vadd.f32 %v1320, %v1571
      %v1580 = vadd.f32 %v1321, %v1572
      %v1581 = vadd.f32 %v1322, %v1573
      %v1582 = vadd.f32 %v1323, %v1574
      %v1583 = vadd.f32 %v1324, %v1575
      %v1584 = vadd.f32 %v1325, %v1576
      %v1586 = vlaneseq
      %v1587 = vshrl.u32 %v1586, 7
      %v1588 = vsub.s32 0, %v1587
      %v1589 = vrot.slane %v393, %v1588
      %v1591 = vmul.f32 %v1577, %v1589
      %v1592 = vmul.f32 %v1578, %v1589
      %v1593 = vmul.f32 %v1579, %v1589
      %v1594 = vmul.f32 %v1580, %v1589
      %v1595 = vmul.f32 %v1581, %v1589
      %v1596 = vmul.f32 %v1582, %v1589
      %v1597 = vmul.f32 %v1583, %v1589
      %v1598 = vmul.f32 %v1584, %v1589
      %v1600 = vlaneseq
      %v1601 = vshrl.u32 %v1600, 7
      %v1602 = vsub.s32 0, %v1601
      %v1603 = vrot.slane %v394, %v1602
      %v1605 = vadd.f32 %v1591, %v1603
      %v1606 = vadd.f32 %v1592, %v1603
      %v1607 = vadd.f32 %v1593, %v1603
      %v1608 = vadd.f32 %v1594, %v1603
      %v1609 = vadd.f32 %v1595, %v1603
      %v1610 = vadd.f32 %v1596, %v1603
      %v1611 = vadd.f32 %v1597, %v1603
      %v1612 = vadd.f32 %v1598, %v1603
      %v1613 = vxor.u32 %v1605, 2147483648
      %v1614 = vxor.u32 %v1606, 2147483648
      %v1615 = vxor.u32 %v1607, 2147483648
      %v1616 = vxor.u32 %v1608, 2147483648
      %v1617 = vxor.u32 %v1609, 2147483648
      %v1618 = vxor.u32 %v1610, 2147483648
      %v1619 = vxor.u32 %v1611, 2147483648
      %v1620 = vxor.u32 %v1612, 2147483648
      %v1621 = vmul.f32 %v1613, 1.442695
      %v1622 = vpow.pop %v1621
      %v1623 = vmul.f32 %v1614, 1.442695
      %v1624 = vpow.pop %v1623
      %v1625 = vmul.f32 %v1615, 1.442695
      %v1626 = vpow.pop %v1625
      %v1627 = vmul.f32 %v1616, 1.442695
      %v1628 = vpow.pop %v1627
      %v1629 = vmul.f32 %v1617, 1.442695
      %v1630 = vpow.pop %v1629
      %v1631 = vmul.f32 %v1618, 1.442695
      %v1632 = vpow.pop %v1631
      %v1633 = vmul.f32 %v1619, 1.442695
      %v1634 = vpow.pop %v1633
      %v1635 = vmul.f32 %v1620, 1.442695
      %v1636 = vpow.pop %v1635
      %v1637 = vadd.f32 %v1622, 1.0
      %v1638 = vadd.f32 %v1624, 1.0
      %v1639 = vadd.f32 %v1626, 1.0
      %v1640 = vadd.f32 %v1628, 1.0
      %v1641 = vadd.f32 %v1630, 1.0
      %v1642 = vadd.f32 %v1632, 1.0
      %v1643 = vadd.f32 %v1634, 1.0
      %v1644 = vadd.f32 %v1636, 1.0
      %v1645 = vrcp.pop %v1637
      %v1646 = vmul.f32 1.0, %v1645
      %v1647 = vrcp.pop %v1638
      %v1648 = vmul.f32 1.0, %v1647
      %v1649 = vrcp.pop %v1639
      %v1650 = vmul.f32 1.0, %v1649
      %v1651 = vrcp.pop %v1640
      %v1652 = vmul.f32 1.0, %v1651
      %v1653 = vrcp.pop %v1641
      %v1654 = vmul.f32 1.0, %v1653
      %v1655 = vrcp.pop %v1642
      %v1656 = vmul.f32 1.0, %v1655
      %v1657 = vrcp.pop %v1643
      %v1658 = vmul.f32 1.0, %v1657
      %v1659 = vrcp.pop %v1644
      %v1660 = vmul.f32 1.0, %v1659
      %v1661 = vmul.f32 %v1605, %v1646
      %v1662 = vmul.f32 %v1606, %v1648
      %v1663 = vmul.f32 %v1607, %v1650
      %v1664 = vmul.f32 %v1608, %v1652
      %v1665 = vmul.f32 %v1609, %v1654
      %v1666 = vmul.f32 %v1610, %v1656
      %v1667 = vmul.f32 %v1611, %v1658
      %v1668 = vmul.f32 %v1612, %v1660
      %v1669 = vadd.f32 %v1661, %v395
      %v1670 = vadd.f32 %v1662, %v396
      %v1671 = vadd.f32 %v1663, %v397
      %v1672 = vadd.f32 %v1664, %v398
      %v1673 = vadd.f32 %v1665, %v399
      %v1674 = vadd.f32 %v1666, %v400
      %v1675 = vadd.f32 %v1667, %v401
      %v1676 = vadd.f32 %v1668, %v402
      %1677 = vst.msk [vmem:[%s387] sm:$0xff] %vm407, %v1669
      %1678 = vst.msk [vmem:[%s387 + $0x8] sm:$0xff] %vm407, %v1670
      %1679 = vst.msk [vmem:[%s387 + $0x10] sm:$0xff] %vm407, %v1671
      %1680 = vst.msk [vmem:[%s387 + $0x18] sm:$0xff] %vm407, %v1672
      %1681 = vst.msk [vmem:[%s387 + $0x20] sm:$0xff] %vm407, %v1673
      %1682 = vst.msk [vmem:[%s387 + $0x28] sm:$0xff] %vm407, %v1674
      %1683 = vst.msk [vmem:[%s387 + $0x30] sm:$0xff] %vm407, %v1675
      %1684 = vst.msk [vmem:[%s387 + $0x38] sm:$0xff] %vm407, %v1676
      %s1685 = smul.u32 4, %s24
      %p1686 = scmp.lt.s32.totalorder %s23, 1
      %s1687 = scalar_select %p1686, %s23, 1
      %p1688 = scmp.lt.s32.totalorder %s1685, 15
      %s1689 = scalar_select %p1688, %s1685, 15
      %s1690 = smul.addr %s1689, 2
      %s1691 = smul.addr %s1687, 32
      %s1692 = sadd.s32 %s1690, %s1691
      %s1693 = smul.addr %s1692, 8
      %s1694 = scalar_lea.vmem %s8, %s1693
      // Predicated region
      $region53: #{tpu_custom_call.1} parent=51 // pred_check
        %p1695 = pneg %p233
      $region54: #{tpu_custom_call.1} parent=51 // pred_check_branch
        %1697 = sbr.rel (%p1695) target = $region56
      $region55: #{tpu_custom_call.1} parent=51 // pred_region
        %s1698 = smul.u32 4, %s24
      $region56: #{tpu_custom_call.1} parent=51 // pred_fallthru
        _
    $region52: #{tpu_custom_call.1} parent=5 // pred_fallthru
      _
    %p1699 = scmp.le.s32.totalorder 2, %s14
    // Predicated region
    $region57: #{tpu_custom_call.1} parent=5 // pred_check
      %p1700 = pneg %p1699
    $region58: #{tpu_custom_call.1} parent=5 // pred_check_branch
      %1702 = sbr.rel (%p1700) target = $region60
    $region59: #{tpu_custom_call.1} parent=5 // pred_region
      %s1703 = ssub.s32 %s14, 2
      // Predicated region
      $region61: #{tpu_custom_call.1} parent=59 // pred_check
        %p1704 = pneg %p239
      $region62: #{tpu_custom_call.1} parent=59 // pred_check_branch
        %1706 = sbr.rel (%p1704) target = $region64
      $region63: #{tpu_custom_call.1} parent=59 // pred_region
        %s1707 = smul.u32 4, %s26
        %p1708 = scmp.lt.s32.totalorder %s25, 1
        %s1709 = scalar_select %p1708, %s25, 1
        %p1710 = scmp.lt.s32.totalorder %s1707, 15
        %s1711 = scalar_select %p1710, %s1707, 15
        %s1712 = smul.addr %s1711, 2
        %s1713 = smul.addr %s1709, 32
        %s1714 = sadd.s32 %s1712, %s1713
        %s1715 = smul.addr %s1714, 8
        %s1716 = scalar_lea.vmem %s8, %s1715
      $region64: #{tpu_custom_call.1} parent=59 // pred_fallthru
        _
    $region60: #{tpu_custom_call.1} parent=5 // pred_fallthru
      _
  $region6: #{tpu_custom_call.1} parent=0 // loop_footer
    %s18 = sadd.s32 1, %s14
  $region7: #{tpu_custom_call.1} parent=0 // loop_footer_branch
    %13 = sbr.rel target = $region3
  $region8: #{tpu_custom_call.1} parent=0 // loop_exit
    _

</llo_original>
